<compile_context>
chip_gen: v5e
topology: v5e:2x2
jax: 0.10.0
libtpu: 0.0.40
codegen_flags: <defaults>
</compile_context>

<pallas_src>
import functools

import jax
import jax.numpy as jnp
from jax.experimental import pallas as pl
from jax.experimental.pallas import tpu as pltpu


def _vmem():
    return pl.BlockSpec(memory_space=pltpu.MemorySpace.VMEM)


def _gat_fused_kernel(x_ref, adj_ref, enc_w_ref, enc_b_ref, w_aug_ref,
                      gat_b_ref, mix_ref, dec_w_ref, dec_b_ref,
                      out_ref, heads_scr,
                      *, nlayers, nheads, nhid, use_bf16_exp):
    # ---- encoder + ReLU (MXU) ----
    X = jnp.dot(x_ref[...], enc_w_ref[...], preferred_element_type=jnp.float32)
    X = jnp.maximum(X + enc_b_ref[...], 0.0)                       # [N, nhid]

    # ---- head/layer-independent work, hoisted out of all loops ----
    # Additive softmax mask: 0 where edge (incl. self-loop), -1e30 elsewhere.
    # Built once; inside the hot loop masking is a single add, not a select.
    adj_f = adj_ref[...].astype(jnp.float32)                       # int8 0/1 -> f32
    mask_bias = jnp.where(adj_f > 0.0, 0.0, -1e30)                 # [N, N]

    W_aug = w_aug_ref[...]                                         # [nhid, H*nhid + 2H]
    bias = gat_b_ref[...]                                          # [1, H*nhid]
    mix = mix_ref[...]                                             # [H*nhid, nhid]
    hn = nheads * nhid

    # Layer loop fully unrolled at trace time (shared conv weights, small nlayers).
    for _ in range(nlayers):
        # Single fused projection matmul: [xp | a_dst | a_src]  (att vectors folded
        # into W_aug host-side) -> one MXU push per layer instead of three.
        proj = jnp.dot(X, W_aug, preferred_element_type=jnp.float32)   # [N, H*nhid+2H]
        xp = proj[:, :hn]                                              # [N, H*nhid]
        a_dst = proj[:, hn:hn + nheads]                                # [N, H]
        a_src_rows = proj[:, hn + nheads:hn + 2 * nheads].T            # [H, N] (one small XLU transpose/layer)

        for h in range(nheads):                                        # unrolled (H small)
            xh16 = xp[:, h * nhid:(h + 1) * nhid].astype(jnp.bfloat16)  # [N, nhid]
            # e[i, j] = LeakyReLU(a_dst[i] + a_src[j], 0.2), additively masked.
            e = a_dst[:, h:h + 1] + a_src_rows[h:h + 1, :]             # [N, N]
            e = jnp.maximum(e, 0.2 * e)                                # LeakyReLU: mul+max
            e = e + mask_bias                                          # masking: single add
            e = e - jnp.max(e, axis=1, keepdims=True)
            if use_bf16_exp:                                           # v6e/v7x: bf16 EUP path
                p16 = jnp.exp(e.astype(jnp.bfloat16))                  # masked entries -> exactly 0
                p32 = p16.astype(jnp.float32)
            else:                                                      # v5e: no bf16 VPU/EUP
                p32 = jnp.exp(e)
                p16 = p32.astype(jnp.bfloat16)
            # Deferred normalization: aggregate the UNNORMALIZED probabilities on the
            # MXU (bf16 operands, f32 accumulation), scale the [N, nhid] result by the
            # approx-reciprocal row sum afterwards (EUP slot).
            inv = pl.reciprocal(jnp.sum(p32, axis=1, keepdims=True), approx=True)  # [N, 1]
            agg = jnp.dot(p16, xh16, preferred_element_type=jnp.float32)           # [N, nhid]
            head = jnp.maximum(agg * inv + bias[:, h * nhid:(h + 1) * nhid], 0.0)  # act_fn = ReLU
            # Lane-offset store of this head's slab into the flat [N, H*nhid] scratch
            # (GATConv concat layout) -- no concatenate / relayout.
            heads_scr[:, h * nhid:(h + 1) * nhid] = head
        # One K = H*nhid mix matmul implements relu(conv).view(N,-1,H).mean(-1),
        # replacing 4 skinny (K=nhid, 75%-zero) matmuls + accumulating adds.
        X = X + jnp.dot(heads_scr[...], mix, preferred_element_type=jnp.float32)

    # ---- decoder ----
    out = jnp.dot(X, dec_w_ref[...], preferred_element_type=jnp.float32) + dec_b_ref[...]
    out_ref[...] = out.astype(out_ref.dtype)


def gat_forward(x, adj, params, *, nlayers, nheads, nhid):
    n = x.shape[0]
    nclass = params["dec_w"].shape[1]

    # Fold the per-head attention vectors into the projection weight:
    # wa_src[i, h] = sum_c W[i, h*nhid + c] * att_src[h, c]   (likewise dst),
    # and append them as extra columns so the layer needs a single matmul.
    w3 = params["gat_w"].reshape(nhid, nheads, nhid)                  # [in, head, out]
    wa_src = jnp.einsum("ihc,hc->ih", w3, params["att_src"])          # [nhid, H]
    wa_dst = jnp.einsum("ihc,hc->ih", w3, params["att_dst"])          # [nhid, H]
    w_aug = jnp.concatenate([params["gat_w"], wa_dst, wa_src], axis=1)  # [nhid, H*nhid + 2H]

    # Mixing matrix for relu(conv).view(N, -1, H).mean(-1):
    # mixed[n, a] = (1/H) * sum_b flat[n, a*H + b]  =>  mix[f, f // H] = 1/H.
    f = jnp.arange(nheads * nhid)
    mix = jnp.zeros((nheads * nhid, nhid), jnp.float32).at[f, f // nheads].set(1.0 / nheads)

    # adj streamed as int8 0/1 (exact, 4x fewer bytes than f32).
    adj_i8 = (adj > 0).astype(jnp.int8)

    # bf16 exp only where the EUP has a bf16 path (v6e / v7x); f32 elsewhere (v5e etc.).
    kind = jax.devices()[0].device_kind.lower()
    use_bf16_exp = ("v6" in kind) or ("v7" in kind)

    kernel = functools.partial(_gat_fused_kernel, nlayers=nlayers, nheads=nheads,
                               nhid=nhid, use_bf16_exp=use_bf16_exp)
    return pl.pallas_call(
        kernel,
        out_shape=jax.ShapeDtypeStruct((n, nclass), jnp.float32),
        in_specs=[_vmem()] * 9,
        out_specs=_vmem(),
        scratch_shapes=[pltpu.VMEM((n, nheads * nhid), jnp.float32)],
    )(x, adj_i8, params["enc_w"], params["enc_b"], w_aug,
      params["gat_b"], mix, params["dec_w"], params["dec_b"])


def gat_reference(x, adj, params, *, nlayers, nheads, nhid):
    """Pure-JAX f32 reference mirroring the PyTorch module (eval mode)."""
    X = jnp.maximum(x @ params["enc_w"] + params["enc_b"], 0.0)
    mask = adj > 0
    for _ in range(nlayers):
        xp = (X @ params["gat_w"]).reshape(-1, nheads, nhid)          # [N, H, nhid]
        a_src = jnp.einsum("nhc,hc->nh", xp, params["att_src"])       # [N, H]
        a_dst = jnp.einsum("nhc,hc->nh", xp, params["att_dst"])       # [N, H]
        heads = []
        for h in range(nheads):
            e = a_dst[:, h:h + 1] + a_src[:, h][None, :]
            e = jnp.where(e > 0, e, 0.2 * e)
            e = jnp.where(mask, e, -jnp.inf)
            p = jax.nn.softmax(e, axis=1)
            heads.append(p @ xp[:, h, :])
        conv = jnp.concatenate(heads, axis=1) + params["gat_b"]       # [N, H*nhid]
        mixed = jnp.maximum(conv, 0.0).reshape(-1, nhid, nheads).mean(-1)
        X = X + mixed
    return X @ params["dec_w"] + params["dec_b"]


if __name__ == "__main__":
    N, nfeat, nhid, nclass = 32, 16, 32, 5
    nheads, nlayers = 4, 2

    key = jax.random.PRNGKey(0)
    ks = jax.random.split(key, 10)

    # node features
    x = jax.random.normal(ks[0], (N, nfeat), jnp.float32)

    # deterministic edge set: ring + random extra edges; dense adjacency with
    # self-loops (GATConv's add_self_loops behaviour guarantees every dst row
    # has at least one finite attention logit).
    src = jnp.arange(N)
    dst = (src + 1) % N
    extra_src = jax.random.randint(ks[1], (64,), 0, N)
    extra_dst = jax.random.randint(ks[2], (64,), 0, N)
    srcs = jnp.concatenate([src, extra_src])
    dsts = jnp.concatenate([dst, extra_dst])
    adj = jnp.zeros((N, N), jnp.float32).at[dsts, srcs].set(1.0)
    adj = jnp.maximum(adj, jnp.eye(N, dtype=jnp.float32))

    scale = 0.1
    params = {
        "enc_w": scale * jax.random.normal(ks[3], (nfeat, nhid), jnp.float32),
        "enc_b": scale * jax.random.normal(ks[4], (1, nhid), jnp.float32),
        "gat_w": scale * jax.random.normal(ks[5], (nhid, nheads * nhid), jnp.float32),
        "att_src": scale * jax.random.normal(ks[6], (nheads, nhid), jnp.float32),
        "att_dst": scale * jax.random.normal(ks[7], (nheads, nhid), jnp.float32),
        "gat_b": jnp.zeros((1, nheads * nhid), jnp.float32),
        "dec_w": scale * jax.random.normal(ks[8], (nhid, nclass), jnp.float32),
        "dec_b": scale * jax.random.normal(ks[9], (1, nclass), jnp.float32),
    }

    out = gat_forward(x, adj, params, nlayers=nlayers, nheads=nheads, nhid=nhid)
    jax.block_until_ready(out)
    assert out.shape == (N, nclass)

    # tolerance check vs. pure-JAX f32 reference (bf16 MXU operands + approx
    # reciprocal in the kernel => small deviation expected).
    ref = gat_reference(x, adj, params, nlayers=nlayers, nheads=nheads, nhid=nhid)
    max_err = float(jnp.max(jnp.abs(out - ref)))
    assert max_err < 5e-2, f"max abs err vs reference: {max_err}"

    print("KERNEL_OK")
</pallas_src>

<mosaic_0001>
module attributes {stable_mosaic.version = 11 : i64} {
  func.func @_gat_fused_kernel(%arg0: memref<32x16xf32, #tpu.memory_space<vmem>>, %arg1: memref<32x32xi8, #tpu.memory_space<vmem>>, %arg2: memref<16x32xf32, #tpu.memory_space<vmem>>, %arg3: memref<1x32xf32, #tpu.memory_space<vmem>>, %arg4: memref<32x136xf32, #tpu.memory_space<vmem>>, %arg5: memref<1x128xf32, #tpu.memory_space<vmem>>, %arg6: memref<128x32xf32, #tpu.memory_space<vmem>>, %arg7: memref<32x5xf32, #tpu.memory_space<vmem>>, %arg8: memref<1x5xf32, #tpu.memory_space<vmem>>, %arg9: memref<32x5xf32, #tpu.memory_space<vmem>>, %arg10: memref<32x128xf32, #tpu.memory_space<vmem>>) attributes {dimension_semantics = [], scalar_prefetch = 0 : i64, scratch_operands = 1 : i64, tpu.core_type = #tpu.core_type<tc>} {
    %c0 = arith.constant 0 : index
    %c0_0 = arith.constant 0 : index
    %0 = vector.load %arg0[%c0, %c0_0] : memref<32x16xf32, #tpu.memory_space<vmem>>, vector<32x16xf32>
    %c0_1 = arith.constant 0 : index
    %c0_2 = arith.constant 0 : index
    %1 = vector.load %arg2[%c0_1, %c0_2] : memref<16x32xf32, #tpu.memory_space<vmem>>, vector<16x32xf32>
    %cst = arith.constant dense<0.000000e+00> : vector<32x32xf32>
    %2 = tpu.matmul %0, %1, %cst {dimension_numbers = #tpu.dot_dimension_numbers<[1], [0], [0], [1], [0, 0, 1, 1], [], []>} : vector<32x16xf32>, vector<16x32xf32>, vector<32x32xf32> -> vector<32x32xf32>
    %c0_3 = arith.constant 0 : index
    %c0_4 = arith.constant 0 : index
    %3 = vector.load %arg3[%c0_3, %c0_4] : memref<1x32xf32, #tpu.memory_space<vmem>>, vector<1x32xf32>
    %4 = vector.broadcast %3 : vector<1x32xf32> to vector<32x32xf32>
    %5 = arith.addf %2, %4 : vector<32x32xf32>
    %cst_5 = arith.constant 0.000000e+00 : f32
    %6 = vector.broadcast %cst_5 : f32 to vector<32x32xf32>
    %7 = arith.maximumf %5, %6 : vector<32x32xf32>
    %c0_6 = arith.constant 0 : index
    %c0_7 = arith.constant 0 : index
    %8 = vector.load %arg1[%c0_6, %c0_7] : memref<32x32xi8, #tpu.memory_space<vmem>>, vector<32x32xi8>
    %9 = arith.sitofp %8 : vector<32x32xi8> to vector<32x32xf32>
    %cst_8 = arith.constant 0.000000e+00 : f32
    %10 = vector.broadcast %cst_8 : f32 to vector<32x32xf32>
    %11 = arith.cmpf ogt, %9, %10 : vector<32x32xf32>
    %cst_9 = arith.constant 0.000000e+00 : f32
    %cst_10 = arith.constant -1.000000e+30 : f32
    %12 = vector.broadcast %cst_9 : f32 to vector<32x32xf32>
    %13 = vector.broadcast %cst_10 : f32 to vector<32x32xf32>
    %14 = arith.select %11, %12, %13 : vector<32x32xi1>, vector<32x32xf32>
    %c0_11 = arith.constant 0 : index
    %c0_12 = arith.constant 0 : index
    %15 = vector.load %arg4[%c0_11, %c0_12] : memref<32x136xf32, #tpu.memory_space<vmem>>, vector<32x136xf32>
    %c0_13 = arith.constant 0 : index
    %c0_14 = arith.constant 0 : index
    %16 = vector.load %arg5[%c0_13, %c0_14] : memref<1x128xf32, #tpu.memory_space<vmem>>, vector<1x128xf32>
    %c0_15 = arith.constant 0 : index
    %c0_16 = arith.constant 0 : index
    %17 = vector.load %arg6[%c0_15, %c0_16] : memref<128x32xf32, #tpu.memory_space<vmem>>, vector<128x32xf32>
    %cst_17 = arith.constant dense<0.000000e+00> : vector<32x136xf32>
    %18 = tpu.matmul %7, %15, %cst_17 {dimension_numbers = #tpu.dot_dimension_numbers<[1], [0], [0], [1], [0, 0, 1, 1], [], []>} : vector<32x32xf32>, vector<32x136xf32>, vector<32x136xf32> -> vector<32x136xf32>
    %19 = vector.extract_strided_slice %18 {offsets = [0, 0], sizes = [32, 128], strides = [1, 1]} : vector<32x136xf32> to vector<32x128xf32>
    %20 = vector.extract_strided_slice %18 {offsets = [0, 128], sizes = [32, 4], strides = [1, 1]} : vector<32x136xf32> to vector<32x4xf32>
    %21 = vector.extract_strided_slice %18 {offsets = [0, 132], sizes = [32, 4], strides = [1, 1]} : vector<32x136xf32> to vector<32x4xf32>
    %22 = tpu.transpose %21, [1, 0] : vector<32x4xf32> -> vector<4x32xf32>
    %23 = vector.extract_strided_slice %19 {offsets = [0, 0], sizes = [32, 32], strides = [1, 1]} : vector<32x128xf32> to vector<32x32xf32>
    %24 = arith.truncf %23 : vector<32x32xf32> to vector<32x32xbf16>
    %25 = vector.extract_strided_slice %20 {offsets = [0, 0], sizes = [32, 1], strides = [1, 1]} : vector<32x4xf32> to vector<32x1xf32>
    %26 = vector.extract_strided_slice %22 {offsets = [0, 0], sizes = [1, 32], strides = [1, 1]} : vector<4x32xf32> to vector<1x32xf32>
    %27 = vector.broadcast %25 : vector<32x1xf32> to vector<32x32xf32>
    %28 = vector.broadcast %26 : vector<1x32xf32> to vector<32x32xf32>
    %29 = arith.addf %27, %28 : vector<32x32xf32>
    %cst_18 = arith.constant 2.000000e-01 : f32
    %30 = vector.broadcast %cst_18 : f32 to vector<32x32xf32>
    %31 = arith.mulf %30, %29 : vector<32x32xf32>
    %32 = arith.maximumf %29, %31 : vector<32x32xf32>
    %33 = arith.addf %32, %14 : vector<32x32xf32>
    %cst_19 = arith.constant dense<0xFF800000> : vector<32xf32>
    %34 = vector.multi_reduction <maximumf>, %33, %cst_19 [1] : vector<32x32xf32> to vector<32xf32>
    %35 = vector.shape_cast %34 : vector<32xf32> to vector<32x1xf32>
    %36 = vector.broadcast %35 : vector<32x1xf32> to vector<32x32xf32>
    %37 = arith.subf %33, %36 : vector<32x32xf32>
    %38 = math.exp %37 : vector<32x32xf32>
    %39 = arith.truncf %38 : vector<32x32xf32> to vector<32x32xbf16>
    %cst_20 = arith.constant dense<0.000000e+00> : vector<32xf32>
    %40 = vector.multi_reduction <add>, %38, %cst_20 [1] : vector<32x32xf32> to vector<32xf32>
    %41 = vector.shape_cast %40 : vector<32xf32> to vector<32x1xf32>
    %42 = tpu.reciprocal %41 {approx = true} : vector<32x1xf32> -> vector<32x1xf32>
    %cst_21 = arith.constant dense<0.000000e+00> : vector<32x32xf32>
    %43 = tpu.matmul %39, %24, %cst_21 {dimension_numbers = #tpu.dot_dimension_numbers<[1], [0], [0], [1], [0, 0, 1, 1], [], []>} : vector<32x32xbf16>, vector<32x32xbf16>, vector<32x32xf32> -> vector<32x32xf32>
    %44 = vector.broadcast %42 : vector<32x1xf32> to vector<32x32xf32>
    %45 = arith.mulf %43, %44 : vector<32x32xf32>
    %46 = vector.extract_strided_slice %16 {offsets = [0, 0], sizes = [1, 32], strides = [1, 1]} : vector<1x128xf32> to vector<1x32xf32>
    %47 = vector.broadcast %46 : vector<1x32xf32> to vector<32x32xf32>
    %48 = arith.addf %45, %47 : vector<32x32xf32>
    %cst_22 = arith.constant 0.000000e+00 : f32
    %49 = vector.broadcast %cst_22 : f32 to vector<32x32xf32>
    %50 = arith.maximumf %48, %49 : vector<32x32xf32>
    %c0_23 = arith.constant 0 : index
    %c0_24 = arith.constant 0 : index
    %51 = vector.load %arg10[%c0_23, %c0_24] : memref<32x128xf32, #tpu.memory_space<vmem>>, vector<32x32xf32>
    tpu.vector_store %arg10[%c0_23, %c0_24], %50 {strides = array<i32>} : memref<32x128xf32, #tpu.memory_space<vmem>>, vector<32x32xf32>,
    %52 = vector.extract_strided_slice %19 {offsets = [0, 32], sizes = [32, 32], strides = [1, 1]} : vector<32x128xf32> to vector<32x32xf32>
    %53 = arith.truncf %52 : vector<32x32xf32> to vector<32x32xbf16>
    %54 = vector.extract_strided_slice %20 {offsets = [0, 1], sizes = [32, 1], strides = [1, 1]} : vector<32x4xf32> to vector<32x1xf32>
    %55 = vector.extract_strided_slice %22 {offsets = [1, 0], sizes = [1, 32], strides = [1, 1]} : vector<4x32xf32> to vector<1x32xf32>
    %56 = vector.broadcast %54 : vector<32x1xf32> to vector<32x32xf32>
    %57 = vector.broadcast %55 : vector<1x32xf32> to vector<32x32xf32>
    %58 = arith.addf %56, %57 : vector<32x32xf32>
    %cst_25 = arith.constant 2.000000e-01 : f32
    %59 = vector.broadcast %cst_25 : f32 to vector<32x32xf32>
    %60 = arith.mulf %59, %58 : vector<32x32xf32>
    %61 = arith.maximumf %58, %60 : vector<32x32xf32>
    %62 = arith.addf %61, %14 : vector<32x32xf32>
    %cst_26 = arith.constant dense<0xFF800000> : vector<32xf32>
    %63 = vector.multi_reduction <maximumf>, %62, %cst_26 [1] : vector<32x32xf32> to vector<32xf32>
    %64 = vector.shape_cast %63 : vector<32xf32> to vector<32x1xf32>
    %65 = vector.broadcast %64 : vector<32x1xf32> to vector<32x32xf32>
    %66 = arith.subf %62, %65 : vector<32x32xf32>
    %67 = math.exp %66 : vector<32x32xf32>
    %68 = arith.truncf %67 : vector<32x32xf32> to vector<32x32xbf16>
    %cst_27 = arith.constant dense<0.000000e+00> : vector<32xf32>
    %69 = vector.multi_reduction <add>, %67, %cst_27 [1] : vector<32x32xf32> to vector<32xf32>
    %70 = vector.shape_cast %69 : vector<32xf32> to vector<32x1xf32>
    %71 = tpu.reciprocal %70 {approx = true} : vector<32x1xf32> -> vector<32x1xf32>
    %cst_28 = arith.constant dense<0.000000e+00> : vector<32x32xf32>
    %72 = tpu.matmul %68, %53, %cst_28 {dimension_numbers = #tpu.dot_dimension_numbers<[1], [0], [0], [1], [0, 0, 1, 1], [], []>} : vector<32x32xbf16>, vector<32x32xbf16>, vector<32x32xf32> -> vector<32x32xf32>
    %73 = vector.broadcast %71 : vector<32x1xf32> to vector<32x32xf32>
    %74 = arith.mulf %72, %73 : vector<32x32xf32>
    %75 = vector.extract_strided_slice %16 {offsets = [0, 32], sizes = [1, 32], strides = [1, 1]} : vector<1x128xf32> to vector<1x32xf32>
    %76 = vector.broadcast %75 : vector<1x32xf32> to vector<32x32xf32>
    %77 = arith.addf %74, %76 : vector<32x32xf32>
    %cst_29 = arith.constant 0.000000e+00 : f32
    %78 = vector.broadcast %cst_29 : f32 to vector<32x32xf32>
    %79 = arith.maximumf %77, %78 : vector<32x32xf32>
    %c0_30 = arith.constant 0 : index
    %c32 = arith.constant 32 : index
    %80 = vector.load %arg10[%c0_30, %c32] : memref<32x128xf32, #tpu.memory_space<vmem>>, vector<32x32xf32>
    tpu.vector_store %arg10[%c0_30, %c32], %79 {strides = array<i32>} : memref<32x128xf32, #tpu.memory_space<vmem>>, vector<32x32xf32>,
    %81 = vector.extract_strided_slice %19 {offsets = [0, 64], sizes = [32, 32], strides = [1, 1]} : vector<32x128xf32> to vector<32x32xf32>
    %82 = arith.truncf %81 : vector<32x32xf32> to vector<32x32xbf16>
    %83 = vector.extract_strided_slice %20 {offsets = [0, 2], sizes = [32, 1], strides = [1, 1]} : vector<32x4xf32> to vector<32x1xf32>
    %84 = vector.extract_strided_slice %22 {offsets = [2, 0], sizes = [1, 32], strides = [1, 1]} : vector<4x32xf32> to vector<1x32xf32>
    %85 = vector.broadcast %83 : vector<32x1xf32> to vector<32x32xf32>
    %86 = vector.broadcast %84 : vector<1x32xf32> to vector<32x32xf32>
    %87 = arith.addf %85, %86 : vector<32x32xf32>
    %cst_31 = arith.constant 2.000000e-01 : f32
    %88 = vector.broadcast %cst_31 : f32 to vector<32x32xf32>
    %89 = arith.mulf %88, %87 : vector<32x32xf32>
    %90 = arith.maximumf %87, %89 : vector<32x32xf32>
    %91 = arith.addf %90, %14 : vector<32x32xf32>
    %cst_32 = arith.constant dense<0xFF800000> : vector<32xf32>
    %92 = vector.multi_reduction <maximumf>, %91, %cst_32 [1] : vector<32x32xf32> to vector<32xf32>
    %93 = vector.shape_cast %92 : vector<32xf32> to vector<32x1xf32>
    %94 = vector.broadcast %93 : vector<32x1xf32> to vector<32x32xf32>
    %95 = arith.subf %91, %94 : vector<32x32xf32>
    %96 = math.exp %95 : vector<32x32xf32>
    %97 = arith.truncf %96 : vector<32x32xf32> to vector<32x32xbf16>
    %cst_33 = arith.constant dense<0.000000e+00> : vector<32xf32>
    %98 = vector.multi_reduction <add>, %96, %cst_33 [1] : vector<32x32xf32> to vector<32xf32>
    %99 = vector.shape_cast %98 : vector<32xf32> to vector<32x1xf32>
    %100 = tpu.reciprocal %99 {approx = true} : vector<32x1xf32> -> vector<32x1xf32>
    %cst_34 = arith.constant dense<0.000000e+00> : vector<32x32xf32>
    %101 = tpu.matmul %97, %82, %cst_34 {dimension_numbers = #tpu.dot_dimension_numbers<[1], [0], [0], [1], [0, 0, 1, 1], [], []>} : vector<32x32xbf16>, vector<32x32xbf16>, vector<32x32xf32> -> vector<32x32xf32>
    %102 = vector.broadcast %100 : vector<32x1xf32> to vector<32x32xf32>
    %103 = arith.mulf %101, %102 : vector<32x32xf32>
    %104 = vector.extract_strided_slice %16 {offsets = [0, 64], sizes = [1, 32], strides = [1, 1]} : vector<1x128xf32> to vector<1x32xf32>
    %105 = vector.broadcast %104 : vector<1x32xf32> to vector<32x32xf32>
    %106 = arith.addf %103, %105 : vector<32x32xf32>
    %cst_35 = arith.constant 0.000000e+00 : f32
    %107 = vector.broadcast %cst_35 : f32 to vector<32x32xf32>
    %108 = arith.maximumf %106, %107 : vector<32x32xf32>
    %c0_36 = arith.constant 0 : index
    %c64 = arith.constant 64 : index
    %109 = vector.load %arg10[%c0_36, %c64] : memref<32x128xf32, #tpu.memory_space<vmem>>, vector<32x32xf32>
    tpu.vector_store %arg10[%c0_36, %c64], %108 {strides = array<i32>} : memref<32x128xf32, #tpu.memory_space<vmem>>, vector<32x32xf32>,
    %110 = vector.extract_strided_slice %19 {offsets = [0, 96], sizes = [32, 32], strides = [1, 1]} : vector<32x128xf32> to vector<32x32xf32>
    %111 = arith.truncf %110 : vector<32x32xf32> to vector<32x32xbf16>
    %112 = vector.extract_strided_slice %20 {offsets = [0, 3], sizes = [32, 1], strides = [1, 1]} : vector<32x4xf32> to vector<32x1xf32>
    %113 = vector.extract_strided_slice %22 {offsets = [3, 0], sizes = [1, 32], strides = [1, 1]} : vector<4x32xf32> to vector<1x32xf32>
    %114 = vector.broadcast %112 : vector<32x1xf32> to vector<32x32xf32>
    %115 = vector.broadcast %113 : vector<1x32xf32> to vector<32x32xf32>
    %116 = arith.addf %114, %115 : vector<32x32xf32>
    %cst_37 = arith.constant 2.000000e-01 : f32
    %117 = vector.broadcast %cst_37 : f32 to vector<32x32xf32>
    %118 = arith.mulf %117, %116 : vector<32x32xf32>
    %119 = arith.maximumf %116, %118 : vector<32x32xf32>
    %120 = arith.addf %119, %14 : vector<32x32xf32>
    %cst_38 = arith.constant dense<0xFF800000> : vector<32xf32>
    %121 = vector.multi_reduction <maximumf>, %120, %cst_38 [1] : vector<32x32xf32> to vector<32xf32>
    %122 = vector.shape_cast %121 : vector<32xf32> to vector<32x1xf32>
    %123 = vector.broadcast %122 : vector<32x1xf32> to vector<32x32xf32>
    %124 = arith.subf %120, %123 : vector<32x32xf32>
    %125 = math.exp %124 : vector<32x32xf32>
    %126 = arith.truncf %125 : vector<32x32xf32> to vector<32x32xbf16>
    %cst_39 = arith.constant dense<0.000000e+00> : vector<32xf32>
    %127 = vector.multi_reduction <add>, %125, %cst_39 [1] : vector<32x32xf32> to vector<32xf32>
    %128 = vector.shape_cast %127 : vector<32xf32> to vector<32x1xf32>
    %129 = tpu.reciprocal %128 {approx = true} : vector<32x1xf32> -> vector<32x1xf32>
    %cst_40 = arith.constant dense<0.000000e+00> : vector<32x32xf32>
    %130 = tpu.matmul %126, %111, %cst_40 {dimension_numbers = #tpu.dot_dimension_numbers<[1], [0], [0], [1], [0, 0, 1, 1], [], []>} : vector<32x32xbf16>, vector<32x32xbf16>, vector<32x32xf32> -> vector<32x32xf32>
    %131 = vector.broadcast %129 : vector<32x1xf32> to vector<32x32xf32>
    %132 = arith.mulf %130, %131 : vector<32x32xf32>
    %133 = vector.extract_strided_slice %16 {offsets = [0, 96], sizes = [1, 32], strides = [1, 1]} : vector<1x128xf32> to vector<1x32xf32>
    %134 = vector.broadcast %133 : vector<1x32xf32> to vector<32x32xf32>
    %135 = arith.addf %132, %134 : vector<32x32xf32>
    %cst_41 = arith.constant 0.000000e+00 : f32
    %136 = vector.broadcast %cst_41 : f32 to vector<32x32xf32>
    %137 = arith.maximumf %135, %136 : vector<32x32xf32>
    %c0_42 = arith.constant 0 : index
    %c96 = arith.constant 96 : index
    %138 = vector.load %arg10[%c0_42, %c96] : memref<32x128xf32, #tpu.memory_space<vmem>>, vector<32x32xf32>
    tpu.vector_store %arg10[%c0_42, %c96], %137 {strides = array<i32>} : memref<32x128xf32, #tpu.memory_space<vmem>>, vector<32x32xf32>,
    %c0_43 = arith.constant 0 : index
    %c0_44 = arith.constant 0 : index
    %139 = vector.load %arg10[%c0_43, %c0_44] : memref<32x128xf32, #tpu.memory_space<vmem>>, vector<32x128xf32>
    %cst_45 = arith.constant dense<0.000000e+00> : vector<32x32xf32>
    %140 = tpu.matmul %139, %17, %cst_45 {dimension_numbers = #tpu.dot_dimension_numbers<[1], [0], [0], [1], [0, 0, 1, 1], [], []>} : vector<32x128xf32>, vector<128x32xf32>, vector<32x32xf32> -> vector<32x32xf32>
    %141 = arith.addf %7, %140 : vector<32x32xf32>
    %cst_46 = arith.constant dense<0.000000e+00> : vector<32x136xf32>
    %142 = tpu.matmul %141, %15, %cst_46 {dimension_numbers = #tpu.dot_dimension_numbers<[1], [0], [0], [1], [0, 0, 1, 1], [], []>} : vector<32x32xf32>, vector<32x136xf32>, vector<32x136xf32> -> vector<32x136xf32>
    %143 = vector.extract_strided_slice %142 {offsets = [0, 0], sizes = [32, 128], strides = [1, 1]} : vector<32x136xf32> to vector<32x128xf32>
    %144 = vector.extract_strided_slice %142 {offsets = [0, 128], sizes = [32, 4], strides = [1, 1]} : vector<32x136xf32> to vector<32x4xf32>
    %145 = vector.extract_strided_slice %142 {offsets = [0, 132], sizes = [32, 4], strides = [1, 1]} : vector<32x136xf32> to vector<32x4xf32>
    %146 = tpu.transpose %145, [1, 0] : vector<32x4xf32> -> vector<4x32xf32>
    %147 = vector.extract_strided_slice %143 {offsets = [0, 0], sizes = [32, 32], strides = [1, 1]} : vector<32x128xf32> to vector<32x32xf32>
    %148 = arith.truncf %147 : vector<32x32xf32> to vector<32x32xbf16>
    %149 = vector.extract_strided_slice %144 {offsets = [0, 0], sizes = [32, 1], strides = [1, 1]} : vector<32x4xf32> to vector<32x1xf32>
    %150 = vector.extract_strided_slice %146 {offsets = [0, 0], sizes = [1, 32], strides = [1, 1]} : vector<4x32xf32> to vector<1x32xf32>
    %151 = vector.broadcast %149 : vector<32x1xf32> to vector<32x32xf32>
    %152 = vector.broadcast %150 : vector<1x32xf32> to vector<32x32xf32>
    %153 = arith.addf %151, %152 : vector<32x32xf32>
    %cst_47 = arith.constant 2.000000e-01 : f32
    %154 = vector.broadcast %cst_47 : f32 to vector<32x32xf32>
    %155 = arith.mulf %154, %153 : vector<32x32xf32>
    %156 = arith.maximumf %153, %155 : vector<32x32xf32>
    %157 = arith.addf %156, %14 : vector<32x32xf32>
    %cst_48 = arith.constant dense<0xFF800000> : vector<32xf32>
    %158 = vector.multi_reduction <maximumf>, %157, %cst_48 [1] : vector<32x32xf32> to vector<32xf32>
    %159 = vector.shape_cast %158 : vector<32xf32> to vector<32x1xf32>
    %160 = vector.broadcast %159 : vector<32x1xf32> to vector<32x32xf32>
    %161 = arith.subf %157, %160 : vector<32x32xf32>
    %162 = math.exp %161 : vector<32x32xf32>
    %163 = arith.truncf %162 : vector<32x32xf32> to vector<32x32xbf16>
    %cst_49 = arith.constant dense<0.000000e+00> : vector<32xf32>
    %164 = vector.multi_reduction <add>, %162, %cst_49 [1] : vector<32x32xf32> to vector<32xf32>
    %165 = vector.shape_cast %164 : vector<32xf32> to vector<32x1xf32>
    %166 = tpu.reciprocal %165 {approx = true} : vector<32x1xf32> -> vector<32x1xf32>
    %cst_50 = arith.constant dense<0.000000e+00> : vector<32x32xf32>
    %167 = tpu.matmul %163, %148, %cst_50 {dimension_numbers = #tpu.dot_dimension_numbers<[1], [0], [0], [1], [0, 0, 1, 1], [], []>} : vector<32x32xbf16>, vector<32x32xbf16>, vector<32x32xf32> -> vector<32x32xf32>
    %168 = vector.broadcast %166 : vector<32x1xf32> to vector<32x32xf32>
    %169 = arith.mulf %167, %168 : vector<32x32xf32>
    %170 = vector.extract_strided_slice %16 {offsets = [0, 0], sizes = [1, 32], strides = [1, 1]} : vector<1x128xf32> to vector<1x32xf32>
    %171 = vector.broadcast %170 : vector<1x32xf32> to vector<32x32xf32>
    %172 = arith.addf %169, %171 : vector<32x32xf32>
    %cst_51 = arith.constant 0.000000e+00 : f32
    %173 = vector.broadcast %cst_51 : f32 to vector<32x32xf32>
    %174 = arith.maximumf %172, %173 : vector<32x32xf32>
    %c0_52 = arith.constant 0 : index
    %c0_53 = arith.constant 0 : index
    %175 = vector.load %arg10[%c0_52, %c0_53] : memref<32x128xf32, #tpu.memory_space<vmem>>, vector<32x32xf32>
    tpu.vector_store %arg10[%c0_52, %c0_53], %174 {strides = array<i32>} : memref<32x128xf32, #tpu.memory_space<vmem>>, vector<32x32xf32>,
    %176 = vector.extract_strided_slice %143 {offsets = [0, 32], sizes = [32, 32], strides = [1, 1]} : vector<32x128xf32> to vector<32x32xf32>
    %177 = arith.truncf %176 : vector<32x32xf32> to vector<32x32xbf16>
    %178 = vector.extract_strided_slice %144 {offsets = [0, 1], sizes = [32, 1], strides = [1, 1]} : vector<32x4xf32> to vector<32x1xf32>
    %179 = vector.extract_strided_slice %146 {offsets = [1, 0], sizes = [1, 32], strides = [1, 1]} : vector<4x32xf32> to vector<1x32xf32>
    %180 = vector.broadcast %178 : vector<32x1xf32> to vector<32x32xf32>
    %181 = vector.broadcast %179 : vector<1x32xf32> to vector<32x32xf32>
    %182 = arith.addf %180, %181 : vector<32x32xf32>
    %cst_54 = arith.constant 2.000000e-01 : f32
    %183 = vector.broadcast %cst_54 : f32 to vector<32x32xf32>
    %184 = arith.mulf %183, %182 : vector<32x32xf32>
    %185 = arith.maximumf %182, %184 : vector<32x32xf32>
    %186 = arith.addf %185, %14 : vector<32x32xf32>
    %cst_55 = arith.constant dense<0xFF800000> : vector<32xf32>
    %187 = vector.multi_reduction <maximumf>, %186, %cst_55 [1] : vector<32x32xf32> to vector<32xf32>
    %188 = vector.shape_cast %187 : vector<32xf32> to vector<32x1xf32>
    %189 = vector.broadcast %188 : vector<32x1xf32> to vector<32x32xf32>
    %190 = arith.subf %186, %189 : vector<32x32xf32>
    %191 = math.exp %190 : vector<32x32xf32>
    %192 = arith.truncf %191 : vector<32x32xf32> to vector<32x32xbf16>
    %cst_56 = arith.constant dense<0.000000e+00> : vector<32xf32>
    %193 = vector.multi_reduction <add>, %191, %cst_56 [1] : vector<32x32xf32> to vector<32xf32>
    %194 = vector.shape_cast %193 : vector<32xf32> to vector<32x1xf32>
    %195 = tpu.reciprocal %194 {approx = true} : vector<32x1xf32> -> vector<32x1xf32>
    %cst_57 = arith.constant dense<0.000000e+00> : vector<32x32xf32>
    %196 = tpu.matmul %192, %177, %cst_57 {dimension_numbers = #tpu.dot_dimension_numbers<[1], [0], [0], [1], [0, 0, 1, 1], [], []>} : vector<32x32xbf16>, vector<32x32xbf16>, vector<32x32xf32> -> vector<32x32xf32>
    %197 = vector.broadcast %195 : vector<32x1xf32> to vector<32x32xf32>
    %198 = arith.mulf %196, %197 : vector<32x32xf32>
    %199 = vector.extract_strided_slice %16 {offsets = [0, 32], sizes = [1, 32], strides = [1, 1]} : vector<1x128xf32> to vector<1x32xf32>
    %200 = vector.broadcast %199 : vector<1x32xf32> to vector<32x32xf32>
    %201 = arith.addf %198, %200 : vector<32x32xf32>
    %cst_58 = arith.constant 0.000000e+00 : f32
    %202 = vector.broadcast %cst_58 : f32 to vector<32x32xf32>
    %203 = arith.maximumf %201, %202 : vector<32x32xf32>
    %c0_59 = arith.constant 0 : index
    %c32_60 = arith.constant 32 : index
    %204 = vector.load %arg10[%c0_59, %c32_60] : memref<32x128xf32, #tpu.memory_space<vmem>>, vector<32x32xf32>
    tpu.vector_store %arg10[%c0_59, %c32_60], %203 {strides = array<i32>} : memref<32x128xf32, #tpu.memory_space<vmem>>, vector<32x32xf32>,
    %205 = vector.extract_strided_slice %143 {offsets = [0, 64], sizes = [32, 32], strides = [1, 1]} : vector<32x128xf32> to vector<32x32xf32>
    %206 = arith.truncf %205 : vector<32x32xf32> to vector<32x32xbf16>
    %207 = vector.extract_strided_slice %144 {offsets = [0, 2], sizes = [32, 1], strides = [1, 1]} : vector<32x4xf32> to vector<32x1xf32>
    %208 = vector.extract_strided_slice %146 {offsets = [2, 0], sizes = [1, 32], strides = [1, 1]} : vector<4x32xf32> to vector<1x32xf32>
    %209 = vector.broadcast %207 : vector<32x1xf32> to vector<32x32xf32>
    %210 = vector.broadcast %208 : vector<1x32xf32> to vector<32x32xf32>
    %211 = arith.addf %209, %210 : vector<32x32xf32>
    %cst_61 = arith.constant 2.000000e-01 : f32
    %212 = vector.broadcast %cst_61 : f32 to vector<32x32xf32>
    %213 = arith.mulf %212, %211 : vector<32x32xf32>
    %214 = arith.maximumf %211, %213 : vector<32x32xf32>
    %215 = arith.addf %214, %14 : vector<32x32xf32>
    %cst_62 = arith.constant dense<0xFF800000> : vector<32xf32>
    %216 = vector.multi_reduction <maximumf>, %215, %cst_62 [1] : vector<32x32xf32> to vector<32xf32>
    %217 = vector.shape_cast %216 : vector<32xf32> to vector<32x1xf32>
    %218 = vector.broadcast %217 : vector<32x1xf32> to vector<32x32xf32>
    %219 = arith.subf %215, %218 : vector<32x32xf32>
    %220 = math.exp %219 : vector<32x32xf32>
    %221 = arith.truncf %220 : vector<32x32xf32> to vector<32x32xbf16>
    %cst_63 = arith.constant dense<0.000000e+00> : vector<32xf32>
    %222 = vector.multi_reduction <add>, %220, %cst_63 [1] : vector<32x32xf32> to vector<32xf32>
    %223 = vector.shape_cast %222 : vector<32xf32> to vector<32x1xf32>
    %224 = tpu.reciprocal %223 {approx = true} : vector<32x1xf32> -> vector<32x1xf32>
    %cst_64 = arith.constant dense<0.000000e+00> : vector<32x32xf32>
    %225 = tpu.matmul %221, %206, %cst_64 {dimension_numbers = #tpu.dot_dimension_numbers<[1], [0], [0], [1], [0, 0, 1, 1], [], []>} : vector<32x32xbf16>, vector<32x32xbf16>, vector<32x32xf32> -> vector<32x32xf32>
    %226 = vector.broadcast %224 : vector<32x1xf32> to vector<32x32xf32>
    %227 = arith.mulf %225, %226 : vector<32x32xf32>
    %228 = vector.extract_strided_slice %16 {offsets = [0, 64], sizes = [1, 32], strides = [1, 1]} : vector<1x128xf32> to vector<1x32xf32>
    %229 = vector.broadcast %228 : vector<1x32xf32> to vector<32x32xf32>
    %230 = arith.addf %227, %229 : vector<32x32xf32>
    %cst_65 = arith.constant 0.000000e+00 : f32
    %231 = vector.broadcast %cst_65 : f32 to vector<32x32xf32>
    %232 = arith.maximumf %230, %231 : vector<32x32xf32>
    %c0_66 = arith.constant 0 : index
    %c64_67 = arith.constant 64 : index
    %233 = vector.load %arg10[%c0_66, %c64_67] : memref<32x128xf32, #tpu.memory_space<vmem>>, vector<32x32xf32>
    tpu.vector_store %arg10[%c0_66, %c64_67], %232 {strides = array<i32>} : memref<32x128xf32, #tpu.memory_space<vmem>>, vector<32x32xf32>,
    %234 = vector.extract_strided_slice %143 {offsets = [0, 96], sizes = [32, 32], strides = [1, 1]} : vector<32x128xf32> to vector<32x32xf32>
    %235 = arith.truncf %234 : vector<32x32xf32> to vector<32x32xbf16>
    %236 = vector.extract_strided_slice %144 {offsets = [0, 3], sizes = [32, 1], strides = [1, 1]} : vector<32x4xf32> to vector<32x1xf32>
    %237 = vector.extract_strided_slice %146 {offsets = [3, 0], sizes = [1, 32], strides = [1, 1]} : vector<4x32xf32> to vector<1x32xf32>
    %238 = vector.broadcast %236 : vector<32x1xf32> to vector<32x32xf32>
    %239 = vector.broadcast %237 : vector<1x32xf32> to vector<32x32xf32>
    %240 = arith.addf %238, %239 : vector<32x32xf32>
    %cst_68 = arith.constant 2.000000e-01 : f32
    %241 = vector.broadcast %cst_68 : f32 to vector<32x32xf32>
    %242 = arith.mulf %241, %240 : vector<32x32xf32>
    %243 = arith.maximumf %240, %242 : vector<32x32xf32>
    %244 = arith.addf %243, %14 : vector<32x32xf32>
    %cst_69 = arith.constant dense<0xFF800000> : vector<32xf32>
    %245 = vector.multi_reduction <maximumf>, %244, %cst_69 [1] : vector<32x32xf32> to vector<32xf32>
    %246 = vector.shape_cast %245 : vector<32xf32> to vector<32x1xf32>
    %247 = vector.broadcast %246 : vector<32x1xf32> to vector<32x32xf32>
    %248 = arith.subf %244, %247 : vector<32x32xf32>
    %249 = math.exp %248 : vector<32x32xf32>
    %250 = arith.truncf %249 : vector<32x32xf32> to vector<32x32xbf16>
    %cst_70 = arith.constant dense<0.000000e+00> : vector<32xf32>
    %251 = vector.multi_reduction <add>, %249, %cst_70 [1] : vector<32x32xf32> to vector<32xf32>
    %252 = vector.shape_cast %251 : vector<32xf32> to vector<32x1xf32>
    %253 = tpu.reciprocal %252 {approx = true} : vector<32x1xf32> -> vector<32x1xf32>
    %cst_71 = arith.constant dense<0.000000e+00> : vector<32x32xf32>
    %254 = tpu.matmul %250, %235, %cst_71 {dimension_numbers = #tpu.dot_dimension_numbers<[1], [0], [0], [1], [0, 0, 1, 1], [], []>} : vector<32x32xbf16>, vector<32x32xbf16>, vector<32x32xf32> -> vector<32x32xf32>
    %255 = vector.broadcast %253 : vector<32x1xf32> to vector<32x32xf32>
    %256 = arith.mulf %254, %255 : vector<32x32xf32>
    %257 = vector.extract_strided_slice %16 {offsets = [0, 96], sizes = [1, 32], strides = [1, 1]} : vector<1x128xf32> to vector<1x32xf32>
    %258 = vector.broadcast %257 : vector<1x32xf32> to vector<32x32xf32>
    %259 = arith.addf %256, %258 : vector<32x32xf32>
    %cst_72 = arith.constant 0.000000e+00 : f32
    %260 = vector.broadcast %cst_72 : f32 to vector<32x32xf32>
    %261 = arith.maximumf %259, %260 : vector<32x32xf32>
    %c0_73 = arith.constant 0 : index
    %c96_74 = arith.constant 96 : index
    %262 = vector.load %arg10[%c0_73, %c96_74] : memref<32x128xf32, #tpu.memory_space<vmem>>, vector<32x32xf32>
    tpu.vector_store %arg10[%c0_73, %c96_74], %261 {strides = array<i32>} : memref<32x128xf32, #tpu.memory_space<vmem>>, vector<32x32xf32>,
    %c0_75 = arith.constant 0 : index
    %c0_76 = arith.constant 0 : index
    %263 = vector.load %arg10[%c0_75, %c0_76] : memref<32x128xf32, #tpu.memory_space<vmem>>, vector<32x128xf32>
    %cst_77 = arith.constant dense<0.000000e+00> : vector<32x32xf32>
    %264 = tpu.matmul %263, %17, %cst_77 {dimension_numbers = #tpu.dot_dimension_numbers<[1], [0], [0], [1], [0, 0, 1, 1], [], []>} : vector<32x128xf32>, vector<128x32xf32>, vector<32x32xf32> -> vector<32x32xf32>
    %265 = arith.addf %141, %264 : vector<32x32xf32>
    %c0_78 = arith.constant 0 : index
    %c0_79 = arith.constant 0 : index
    %266 = vector.load %arg7[%c0_78, %c0_79] : memref<32x5xf32, #tpu.memory_space<vmem>>, vector<32x5xf32>
    %cst_80 = arith.constant dense<0.000000e+00> : vector<32x5xf32>
    %267 = tpu.matmul %265, %266, %cst_80 {dimension_numbers = #tpu.dot_dimension_numbers<[1], [0], [0], [1], [0, 0, 1, 1], [], []>} : vector<32x32xf32>, vector<32x5xf32>, vector<32x5xf32> -> vector<32x5xf32>
    %c0_81 = arith.constant 0 : index
    %c0_82 = arith.constant 0 : index
    %268 = vector.load %arg8[%c0_81, %c0_82] : memref<1x5xf32, #tpu.memory_space<vmem>>, vector<1x5xf32>
    %269 = vector.broadcast %268 : vector<1x5xf32> to vector<32x5xf32>
    %270 = arith.addf %267, %269 : vector<32x5xf32>
    %c0_83 = arith.constant 0 : index
    %c0_84 = arith.constant 0 : index
    %271 = vector.load %arg9[%c0_83, %c0_84] : memref<32x5xf32, #tpu.memory_space<vmem>>, vector<32x5xf32>
    tpu.vector_store %arg9[%c0_83, %c0_84], %270 {strides = array<i32>} : memref<32x5xf32, #tpu.memory_space<vmem>>, vector<32x5xf32>,
    return
  }
}

</mosaic_0001>

<llo_original>
// kernel: tpu_custom_call.1
$region0: #{tpu_custom_call.1}
  #allocation0 [shape = 'u32[]', space=smem, size = 0x4, offset = 0x4, fixed_abs, tag = 'smem constant byte address 0x4 - core index']
  #allocation1 [shape = 'u32[72,128]{1,0:T(1,128)}', space=vmem, size = 0x9000, scoped, tag = 'internal scratch']
  #allocation2 [shape = 'f32[32,128]{1,0:T(8,128)}', space=vmem, size = 0x4000, scoped, tag = 'scratch operand']
  %s0 = inlined_call_operand.vmem [shape: f32[32,16], index: 0, kind: input, shape index: {}]
  %s1 = inlined_call_operand.vmem [shape: s8[32,32], index: 1, kind: input, shape index: {}]
  %s2 = inlined_call_operand.vmem [shape: f32[16,32], index: 2, kind: input, shape index: {}]
  %s3 = inlined_call_operand.vmem [shape: f32[1,32], index: 3, kind: input, shape index: {}]
  %s4 = inlined_call_operand.vmem [shape: f32[32,136], index: 4, kind: input, shape index: {}]
  %s5 = inlined_call_operand.vmem [shape: f32[1,128], index: 5, kind: input, shape index: {}]
  %s6 = inlined_call_operand.vmem [shape: f32[128,32], index: 6, kind: input, shape index: {}]
  %s7 = inlined_call_operand.vmem [shape: f32[32,5], index: 7, kind: input, shape index: {}]
  %s8 = inlined_call_operand.vmem [shape: f32[1,5], index: 8, kind: input, shape index: {}]
  %s9 = inlined_call_operand.vmem [shape: f32[32,5], index: 9, kind: output, shape index: {}]
  %s10 = sld [smem:[#allocation0]]
  $region46: #{tpu_custom_call.1} parent=0
    _
  %s12 = ssub.s32 1, %s10
  %s13 = scalar_select 0, %s12, %s10
  // Predicated region
  $region2: #{tpu_custom_call.1} parent=0 // pred_check
    _
  $region3: #{tpu_custom_call.1} parent=0 // pred_check_branch
    %15 = sbr.rel (0) target = $region5
  $region4: #{tpu_custom_call.1} parent=0 // pred_region
    _
  $region5: #{tpu_custom_call.1} parent=0 // pred_fallthru
    _
  // Predicated region
  $region6: #{tpu_custom_call.1} parent=0 // pred_check
    _
  $region7: #{tpu_custom_call.1} parent=0 // pred_check_branch
    %17 = sbr.rel (0) target = $region9
  $region8: #{tpu_custom_call.1} parent=0 // pred_region
    _
  $region9: #{tpu_custom_call.1} parent=0 // pred_fallthru
    _
  // Predicated region
  $region10: #{tpu_custom_call.1} parent=0 // pred_check
    _
  $region11: #{tpu_custom_call.1} parent=0 // pred_check_branch
    %19 = sbr.rel (0) target = $region13
  $region12: #{tpu_custom_call.1} parent=0 // pred_region
    _
  $region13: #{tpu_custom_call.1} parent=0 // pred_fallthru
    _
  // Predicated region
  $region14: #{tpu_custom_call.1} parent=0 // pred_check
    _
  $region15: #{tpu_custom_call.1} parent=0 // pred_check_branch
    %21 = sbr.rel (0) target = $region17
  $region16: #{tpu_custom_call.1} parent=0 // pred_region
    _
  $region17: #{tpu_custom_call.1} parent=0 // pred_fallthru
    _
  // Predicated region
  $region18: #{tpu_custom_call.1} parent=0 // pred_check
    _
  $region19: #{tpu_custom_call.1} parent=0 // pred_check_branch
    %23 = sbr.rel (0) target = $region21
  $region20: #{tpu_custom_call.1} parent=0 // pred_region
    _
  $region21: #{tpu_custom_call.1} parent=0 // pred_fallthru
    _
  // Predicated region
  $region22: #{tpu_custom_call.1} parent=0 // pred_check
    _
  $region23: #{tpu_custom_call.1} parent=0 // pred_check_branch
    %25 = sbr.rel (0) target = $region25
  $region24: #{tpu_custom_call.1} parent=0 // pred_region
    _
  $region25: #{tpu_custom_call.1} parent=0 // pred_fallthru
    _
  // Predicated region
  $region26: #{tpu_custom_call.1} parent=0 // pred_check
    _
  $region27: #{tpu_custom_call.1} parent=0 // pred_check_branch
    %27 = sbr.rel (0) target = $region29
  $region28: #{tpu_custom_call.1} parent=0 // pred_region
    _
  $region29: #{tpu_custom_call.1} parent=0 // pred_fallthru
    _
  // Predicated region
  $region30: #{tpu_custom_call.1} parent=0 // pred_check
    _
  $region31: #{tpu_custom_call.1} parent=0 // pred_check_branch
    %29 = sbr.rel (0) target = $region33
  $region32: #{tpu_custom_call.1} parent=0 // pred_region
    _
  $region33: #{tpu_custom_call.1} parent=0 // pred_fallthru
    _
  // Predicated region
  $region34: #{tpu_custom_call.1} parent=0 // pred_check
    _
  $region35: #{tpu_custom_call.1} parent=0 // pred_check_branch
    %31 = sbr.rel (0) target = $region37
  $region36: #{tpu_custom_call.1} parent=0 // pred_region
    _
  $region37: #{tpu_custom_call.1} parent=0 // pred_fallthru
    _
  %v33 = vld [vmem:[%s0] sm:$0xff]
  %v34 = vld [vmem:[%s0 + $0x8] sm:$0xff]
  %v35 = vld [vmem:[%s0 + $0x10] sm:$0xff]
  %v36 = vld [vmem:[%s0 + $0x18] sm:$0xff]
  %v37 = vld [vmem:[%s2] sm:$0xff]
  %v38 = vld [vmem:[%s2 + $0x8] sm:$0xff]
  %v39 = vld [vmem:[%s3] sm:$0x1]
  %v41 = vperm.slane %v39, 0
  %vm43 = vcmask 130048
  %v45 = vsel %vm43, %v33, 0
  %v48 = vsel %vm43, %v34, 0
  %v51 = vsel %vm43, %v35, 0
  %v54 = vsel %vm43, %v36, 0
  %56 = vmatpush.msra.mxu0 0.0
  %57 = vmatpush.msra.mxu0 0.0
  %58 = vmatpush.msra.mxu0 0.0
  %59 = vmatpush.msra.mxu0 0.0
  %60 = vmatpush.msra.mxu0 0.0
  %61 = vmatpush.msra.mxu0 0.0
  %62 = vmatpush.msra.mxu0 0.0
  %63 = vmatpush.msra.mxu0 0.0
  %64 = vmatpush.msra.mxu0 0.0
  %65 = vmatpush.msra.mxu0 0.0
  %66 = vmatpush.msra.mxu0 0.0
  %67 = vmatpush.msra.mxu0 0.0
  %68 = vmatpush.msra.mxu0 0.0
  %69 = vmatpush.msra.mxu0 0.0
  %70 = vmatpush.msra.mxu0 %v38
  %71 = vmatpush.msra.mxu0 %v37
  %72 = vmatmul.f32.gmra.mxu0 %v45
  %v73 = vpop.f32.mrf.mxu0
  %v74 = vadd.f32 %v41, %v73
  %75 = vmatmul.f32.gmra.mxu0 %v48
  %v76 = vpop.f32.mrf.mxu0
  %v77 = vadd.f32 %v41, %v76
  %78 = vmatmul.f32.gmra.mxu0 %v51
  %v79 = vpop.f32.mrf.mxu0
  %v80 = vadd.f32 %v41, %v79
  %81 = vmatmul.f32.gmra.mxu0 %v54
  %v82 = vpop.f32.mrf.mxu0
  %v83 = vadd.f32 %v41, %v82
  %84 = vdwg.mxu0
  %v85 = vmax.f32 %v74, 0.0
  %v86 = vmax.f32 %v77, 0.0
  %v87 = vmax.f32 %v80, 0.0
  %v88 = vmax.f32 %v83, 0.0
  %v89 = vld [vmem:[%s1] sm:$0xff]
  %v90 = vunpack.c.0.s8 %v89
  %v91 = vunpack.c.1.s8 %v89
  %v92 = vunpack.c.2.s8 %v89
  %v93 = vunpack.c.3.s8 %v89
  %v94 = vcvt.s32.f32 %v90
  %v95 = vcvt.s32.f32 %v91
  %v96 = vcvt.s32.f32 %v92
  %v97 = vcvt.s32.f32 %v93
  %vm98 = vcmp.gt.f32.partialorder %v94, 0.0
  %vm99 = vcmp.gt.f32.partialorder %v95, 0.0
  %vm100 = vcmp.gt.f32.partialorder %v96, 0.0
  %vm101 = vcmp.gt.f32.partialorder %v97, 0.0
  %v102 = vsel %vm98, 0.0, -1e+30
  %v103 = vsel %vm99, 0.0, -1e+30
  %v104 = vsel %vm100, 0.0, -1e+30
  %v105 = vsel %vm101, 0.0, -1e+30
  %v106 = vld [vmem:[%s4] sm:$0xff]
  %v107 = vld [vmem:[%s4 + $0x8] sm:$0xff]
  %v108 = vld [vmem:[%s4 + $0x10] sm:$0xff]
  %v109 = vld [vmem:[%s4 + $0x18] sm:$0xff]
  %v110 = vld [vmem:[%s4 + $0x20] sm:$0xff]
  %v111 = vld [vmem:[%s4 + $0x28] sm:$0xff]
  %v112 = vld [vmem:[%s4 + $0x30] sm:$0xff]
  %v113 = vld [vmem:[%s4 + $0x38] sm:$0xff]
  %v114 = vld [vmem:[%s5] sm:$0x1]
  %v115 = vld [vmem:[%s6] sm:$0xff]
  %v116 = vld [vmem:[%s6 + $0x8] sm:$0xff]
  %v117 = vld [vmem:[%s6 + $0x10] sm:$0xff]
  %v118 = vld [vmem:[%s6 + $0x18] sm:$0xff]
  %v119 = vld [vmem:[%s6 + $0x20] sm:$0xff]
  %v120 = vld [vmem:[%s6 + $0x28] sm:$0xff]
  %v121 = vld [vmem:[%s6 + $0x30] sm:$0xff]
  %v122 = vld [vmem:[%s6 + $0x38] sm:$0xff]
  %v123 = vld [vmem:[%s6 + $0x40] sm:$0xff]
  %v124 = vld [vmem:[%s6 + $0x48] sm:$0xff]
  %v125 = vld [vmem:[%s6 + $0x50] sm:$0xff]
  %v126 = vld [vmem:[%s6 + $0x58] sm:$0xff]
  %v127 = vld [vmem:[%s6 + $0x60] sm:$0xff]
  %v128 = vld [vmem:[%s6 + $0x68] sm:$0xff]
  %v129 = vld [vmem:[%s6 + $0x70] sm:$0xff]
  %v130 = vld [vmem:[%s6 + $0x78] sm:$0xff]
  %vm131 = vcmask 261120
  %v133 = vsel %vm131, %v85, 0
  %v136 = vsel %vm131, %v86, 0
  %v139 = vsel %vm131, %v87, 0
  %v142 = vsel %vm131, %v88, 0
  %144 = vmatpush.msra.mxu0 0.0
  %145 = vmatpush.msra.mxu0 0.0
  %146 = vmatpush.msra.mxu0 0.0
  %147 = vmatpush.msra.mxu0 0.0
  %148 = vmatpush.msra.mxu0 0.0
  %149 = vmatpush.msra.mxu0 0.0
  %150 = vmatpush.msra.mxu0 0.0
  %151 = vmatpush.msra.mxu0 0.0
  %152 = vmatpush.msra.mxu0 0.0
  %153 = vmatpush.msra.mxu0 0.0
  %154 = vmatpush.msra.mxu0 0.0
  %155 = vmatpush.msra.mxu0 0.0
  %156 = vmatpush.msra.mxu0 %v112
  %157 = vmatpush.msra.mxu0 %v110
  %158 = vmatpush.msra.mxu0 %v108
  %159 = vmatpush.msra.mxu0 %v106
  %160 = vmatmul.f32.gmra.mxu0 %v133
  %v161 = vpop.f32.mrf.mxu0
  %v162 = vadd.f32 0.0, %v161
  %163 = vmatmul.f32.gmra.mxu0 %v136
  %v164 = vpop.f32.mrf.mxu0
  %v165 = vadd.f32 0.0, %v164
  %166 = vmatmul.f32.gmra.mxu0 %v139
  %v167 = vpop.f32.mrf.mxu0
  %v168 = vadd.f32 0.0, %v167
  %169 = vmatmul.f32.gmra.mxu0 %v142
  %v170 = vpop.f32.mrf.mxu0
  %v171 = vadd.f32 0.0, %v170
  %172 = vdwg.mxu0
  %173 = vmatpush.msra.mxu0 0.0
  %174 = vmatpush.msra.mxu0 0.0
  %175 = vmatpush.msra.mxu0 0.0
  %176 = vmatpush.msra.mxu0 0.0
  %177 = vmatpush.msra.mxu0 0.0
  %178 = vmatpush.msra.mxu0 0.0
  %179 = vmatpush.msra.mxu0 0.0
  %180 = vmatpush.msra.mxu0 0.0
  %181 = vmatpush.msra.mxu0 0.0
  %182 = vmatpush.msra.mxu0 0.0
  %183 = vmatpush.msra.mxu0 0.0
  %184 = vmatpush.msra.mxu0 0.0
  %185 = vmatpush.msra.mxu0 %v113
  %186 = vmatpush.msra.mxu0 %v111
  %187 = vmatpush.msra.mxu0 %v109
  %188 = vmatpush.msra.mxu0 %v107
  %189 = vmatmul.f32.gmra.mxu0 %v133
  %v190 = vpop.f32.mrf.mxu0
  %v191 = vadd.f32 0.0, %v190
  %192 = vmatmul.f32.gmra.mxu0 %v136
  %v193 = vpop.f32.mrf.mxu0
  %v194 = vadd.f32 0.0, %v193
  %195 = vmatmul.f32.gmra.mxu0 %v139
  %v196 = vpop.f32.mrf.mxu0
  %v197 = vadd.f32 0.0, %v196
  %198 = vmatmul.f32.gmra.mxu0 %v142
  %v199 = vpop.f32.mrf.mxu0
  %v200 = vadd.f32 0.0, %v199
  %201 = vdwg.mxu0
  %206 = vrot.lane.b32.xlu0 %v191, 124
  %v207 = vpop.permute.xlu0 %206
  %208 = vrot.lane.b32.xlu0 %v194, 124
  %v209 = vpop.permute.xlu0 %208
  %210 = vrot.lane.b32.xlu0 %v197, 124
  %v211 = vpop.permute.xlu0 %210
  %212 = vrot.lane.b32.xlu0 %v200, 124
  %v213 = vpop.permute.xlu0 %212
  %218 = vxpose.xlu0.b32.start [1/16] %v207, 128
  %219 = vxpose.xlu0.b32.cont [2/16] %v209, 128
  %220 = vxpose.xlu0.b32.cont [3/16] %v211, 128
  %221 = vxpose.xlu0.b32.cont [4/16] %v213, 128
  %222 = vxpose.xlu0.b32.cont [5/16] 0.0, 128
  %223 = vxpose.xlu0.b32.cont [6/16] 0.0, 128
  %224 = vxpose.xlu0.b32.cont [7/16] 0.0, 128
  %225 = vxpose.xlu0.b32.cont [8/16] 0.0, 128
  %226 = vxpose.xlu0.b32.cont [9/16] 0.0, 128
  %227 = vxpose.xlu0.b32.cont [10/16] 0.0, 128
  %228 = vxpose.xlu0.b32.cont [11/16] 0.0, 128
  %229 = vxpose.xlu0.b32.cont [12/16] 0.0, 128
  %230 = vxpose.xlu0.b32.cont [13/16] 0.0, 128
  %231 = vxpose.xlu0.b32.cont [14/16] 0.0, 128
  %232 = vxpose.xlu0.b32.cont [15/16] 0.0, 128
  %233 = vxpose.xlu0.b32.end [16/16] 0.0, 128
  %v234 = vpop.trf.xlu0
  %v235 = vpop.trf.xlu0
  %v236 = vpop.trf.xlu0
  %v237 = vpop.trf.xlu0
  %v238 = vpop.trf.xlu0
  %v239 = vpop.trf.xlu0
  %v240 = vpop.trf.xlu0
  %v241 = vpop.trf.xlu0
  %v242 = vpop.trf.xlu0
  %v243 = vpop.trf.xlu0
  %v244 = vpop.trf.xlu0
  %v245 = vpop.trf.xlu0
  %v246 = vpop.trf.xlu0
  %v247 = vpop.trf.xlu0
  %v248 = vpop.trf.xlu0
  %v249 = vpop.trf.xlu0
  %v250 = vpack.c.bf16 %v165, %v162
  %v251 = vpack.c.bf16 %v171, %v168
  %252 = vset.pattern.permute.xlu0 0
  %253 = vperm.xlu0 %252, %v191
  %v254 = vpop.permute.xlu0 %253
  %256 = vset.pattern.permute.xlu0 0
  %257 = vperm.xlu0 %256, %v194
  %v258 = vpop.permute.xlu0 %257
  %260 = vset.pattern.permute.xlu0 0
  %261 = vperm.xlu0 %260, %v197
  %v262 = vpop.permute.xlu0 %261
  %264 = vset.pattern.permute.xlu0 0
  %265 = vperm.xlu0 %264, %v200
  %v266 = vpop.permute.xlu0 %265
  %v268 = vperm.slane %v234, 0
  %v269 = vadd.f32 %v254, %v268
  %v270 = vadd.f32 %v258, %v268
  %v271 = vadd.f32 %v262, %v268
  %v272 = vadd.f32 %v266, %v268
  %v273 = vmul.f32 %v269, 0.2
  %v274 = vmul.f32 %v270, 0.2
  %v275 = vmul.f32 %v271, 0.2
  %v276 = vmul.f32 %v272, 0.2
  %v277 = vmax.f32 %v269, %v273
  %v278 = vmax.f32 %v270, %v274
  %v279 = vmax.f32 %v271, %v275
  %v280 = vmax.f32 %v272, %v276
  %v281 = vadd.f32 %v277, %v102
  %v282 = vadd.f32 %v278, %v103
  %v283 = vadd.f32 %v279, %v104
  %v284 = vadd.f32 %v280, %v105
  %v285 = vsel %vm131, %v281, -inf
  %286 = vmax.xlane.f32.xlu0 %v285
  %v287 = vpop.xlane.xlu0 %286
  %v288 = vsel %vm131, %v282, -inf
  %289 = vmax.xlane.f32.xlu0 %v288
  %v290 = vpop.xlane.xlu0 %289
  %v291 = vsel %vm131, %v283, -inf
  %292 = vmax.xlane.f32.xlu0 %v291
  %v293 = vpop.xlane.xlu0 %292
  %v294 = vsel %vm131, %v284, -inf
  %295 = vmax.xlane.f32.xlu0 %v294
  %v296 = vpop.xlane.xlu0 %295
  %v297 = vsub.f32 %v281, %v287
  %v298 = vsub.f32 %v282, %v290
  %v299 = vsub.f32 %v283, %v293
  %v300 = vsub.f32 %v284, %v296
  %v301 = vmul.f32 %v297, 1.442695
  %v302 = vpow.pop %v301
  %v303 = vmul.f32 %v298, 1.442695
  %v304 = vpow.pop %v303
  %v305 = vmul.f32 %v299, 1.442695
  %v306 = vpow.pop %v305
  %v307 = vmul.f32 %v300, 1.442695
  %v308 = vpow.pop %v307
  %v309 = vpack.c.bf16 %v304, %v302
  %v310 = vpack.c.bf16 %v308, %v306
  %v311 = vsel %vm131, %v302, 0.0
  %312 = vadd.xlane.f32.xlu0 %v311
  %v313 = vpop.xlane.xlu0 %312
  %v314 = vsel %vm131, %v304, 0.0
  %315 = vadd.xlane.f32.xlu0 %v314
  %v316 = vpop.xlane.xlu0 %315
  %v317 = vsel %vm131, %v306, 0.0
  %318 = vadd.xlane.f32.xlu0 %v317
  %v319 = vpop.xlane.xlu0 %318
  %v320 = vsel %vm131, %v308, 0.0
  %321 = vadd.xlane.f32.xlu0 %v320
  %v322 = vpop.xlane.xlu0 %321
  %v323 = vrcp.pop %v313
  %v324 = vrcp.pop %v316
  %v325 = vrcp.pop %v319
  %v326 = vrcp.pop %v322
  %v328 = vsel %vm131, %v309, 0
  %v331 = vsel %vm131, %v310, 0
  %333 = vmatpush.bf16.msra.mxu0 0
  %334 = vmatpush.bf16.msra.mxu0 0
  %335 = vmatpush.bf16.msra.mxu0 0
  %336 = vmatpush.bf16.msra.mxu0 0
  %337 = vmatpush.bf16.msra.mxu0 0
  %338 = vmatpush.bf16.msra.mxu0 0
  %339 = vmatpush.bf16.msra.mxu0 %v251
  %340 = vmatpush.bf16.msra.mxu0 %v250
  %341 = vmatmul.bf16.gmra.mxu0 %v328
  %v342 = vpop.f32.mrf.mxu0
  %v343 = vadd.f32 0.0, %v342
  %v344 = vpop.f32.mrf.mxu0
  %v345 = vadd.f32 0.0, %v344
  %346 = vmatmul.bf16.gmra.mxu0 %v331
  %v347 = vpop.f32.mrf.mxu0
  %v348 = vadd.f32 0.0, %v347
  %v349 = vpop.f32.mrf.mxu0
  %v350 = vadd.f32 0.0, %v349
  %351 = vdwg.mxu0
  %v352 = vmul.f32 %v343, %v323
  %v353 = vmul.f32 %v345, %v324
  %v354 = vmul.f32 %v348, %v325
  %v355 = vmul.f32 %v350, %v326
  %v357 = vperm.slane %v114, 0
  %v359 = vadd.f32 %v352, %v357
  %v360 = vadd.f32 %v353, %v357
  %v361 = vadd.f32 %v354, %v357
  %v362 = vadd.f32 %v355, %v357
  %v363 = vmax.f32 %v359, 0.0
  %v364 = vmax.f32 %v360, 0.0
  %v365 = vmax.f32 %v361, 0.0
  %v366 = vmax.f32 %v362, 0.0
  %367 = vst.msk [vmem:[#allocation2] sm:$0xff] %vm131, %v363
  %368 = vst.msk [vmem:[#allocation2 + $0x8] sm:$0xff] %vm131, %v364
  %369 = vst.msk [vmem:[#allocation2 + $0x10] sm:$0xff] %vm131, %v365
  %370 = vst.msk [vmem:[#allocation2 + $0x18] sm:$0xff] %vm131, %v366
  %371 = vset.pattern.permute.xlu0 1
  %372 = vperm.xlu0 %371, %v191
  %v373 = vpop.permute.xlu0 %372
  %375 = vset.pattern.permute.xlu0 1
  %376 = vperm.xlu0 %375, %v194
  %v377 = vpop.permute.xlu0 %376
  %379 = vset.pattern.permute.xlu0 1
  %380 = vperm.xlu0 %379, %v197
  %v381 = vpop.permute.xlu0 %380
  %383 = vset.pattern.permute.xlu0 1
  %384 = vperm.xlu0 %383, %v200
  %v385 = vpop.permute.xlu0 %384
  %v387 = vperm.slane %v234, 1
  %v388 = vadd.f32 %v373, %v387
  %v389 = vadd.f32 %v377, %v387
  %v390 = vadd.f32 %v381, %v387
  %v391 = vadd.f32 %v385, %v387
  %v392 = vmul.f32 %v388, 0.2
  %v393 = vmul.f32 %v389, 0.2
  %v394 = vmul.f32 %v390, 0.2
  %v395 = vmul.f32 %v391, 0.2
  %v396 = vmax.f32 %v388, %v392
  %v397 = vmax.f32 %v389, %v393
  %v398 = vmax.f32 %v390, %v394
  %v399 = vmax.f32 %v391, %v395
  %v400 = vadd.f32 %v396, %v102
  %v401 = vadd.f32 %v397, %v103
  %v402 = vadd.f32 %v398, %v104
  %v403 = vadd.f32 %v399, %v105
  %v404 = vsel %vm131, %v400, -inf
  %405 = vmax.xlane.f32.xlu0 %v404
  %v406 = vpop.xlane.xlu0 %405
  %v407 = vsel %vm131, %v401, -inf
  %408 = vmax.xlane.f32.xlu0 %v407
  %v409 = vpop.xlane.xlu0 %408
  %v410 = vsel %vm131, %v402, -inf
  %411 = vmax.xlane.f32.xlu0 %v410
  %v412 = vpop.xlane.xlu0 %411
  %v413 = vsel %vm131, %v403, -inf
  %414 = vmax.xlane.f32.xlu0 %v413
  %v415 = vpop.xlane.xlu0 %414
  %v416 = vsub.f32 %v400, %v406
  %v417 = vsub.f32 %v401, %v409
  %v418 = vsub.f32 %v402, %v412
  %v419 = vsub.f32 %v403, %v415
  %v420 = vmul.f32 %v416, 1.442695
  %v421 = vpow.pop %v420
  %v422 = vmul.f32 %v417, 1.442695
  %v423 = vpow.pop %v422
  %v424 = vmul.f32 %v418, 1.442695
  %v425 = vpow.pop %v424
  %v426 = vmul.f32 %v419, 1.442695
  %v427 = vpow.pop %v426
  %v428 = vpack.c.bf16 %v423, %v421
  %v429 = vpack.c.bf16 %v427, %v425
  %v430 = vsel %vm131, %v421, 0.0
  %431 = vadd.xlane.f32.xlu0 %v430
  %v432 = vpop.xlane.xlu0 %431
  %v433 = vsel %vm131, %v423, 0.0
  %434 = vadd.xlane.f32.xlu0 %v433
  %v435 = vpop.xlane.xlu0 %434
  %v436 = vsel %vm131, %v425, 0.0
  %437 = vadd.xlane.f32.xlu0 %v436
  %v438 = vpop.xlane.xlu0 %437
  %v439 = vsel %vm131, %v427, 0.0
  %440 = vadd.xlane.f32.xlu0 %v439
  %v441 = vpop.xlane.xlu0 %440
  %v442 = vrcp.pop %v432
  %v443 = vrcp.pop %v435
  %v444 = vrcp.pop %v438
  %v445 = vrcp.pop %v441
  %448 = vrot.lane.b32.xlu0 %v250, 96
  %v449 = vpop.permute.xlu0 %448
  %450 = vrot.lane.b32.xlu0 %v251, 96
  %v451 = vpop.permute.xlu0 %450
  %v455 = vsel %vm131, %v428, 0
  %v458 = vsel %vm131, %v429, 0
  %460 = vmatpush.bf16.msra.mxu0 0
  %461 = vmatpush.bf16.msra.mxu0 0
  %462 = vmatpush.bf16.msra.mxu0 0
  %463 = vmatpush.bf16.msra.mxu0 0
  %464 = vmatpush.bf16.msra.mxu0 0
  %465 = vmatpush.bf16.msra.mxu0 0
  %466 = vmatpush.bf16.msra.mxu0 %v451
  %467 = vmatpush.bf16.msra.mxu0 %v449
  %468 = vmatmul.bf16.gmra.mxu0 %v455
  %v469 = vpop.f32.mrf.mxu0
  %v470 = vadd.f32 0.0, %v469
  %v471 = vpop.f32.mrf.mxu0
  %v472 = vadd.f32 0.0, %v471
  %473 = vmatmul.bf16.gmra.mxu0 %v458
  %v474 = vpop.f32.mrf.mxu0
  %v475 = vadd.f32 0.0, %v474
  %v476 = vpop.f32.mrf.mxu0
  %v477 = vadd.f32 0.0, %v476
  %478 = vdwg.mxu0
  %v479 = vmul.f32 %v470, %v442
  %v480 = vmul.f32 %v472, %v443
  %v481 = vmul.f32 %v475, %v444
  %v482 = vmul.f32 %v477, %v445
  %483 = vrot.lane.b32.xlu0 %v357, 96
  %v484 = vpop.permute.xlu0 %483
  %v486 = vadd.f32 %v479, %v484
  %v487 = vadd.f32 %v480, %v484
  %v488 = vadd.f32 %v481, %v484
  %v489 = vadd.f32 %v482, %v484
  %v490 = vmax.f32 %v486, 0.0
  %v491 = vmax.f32 %v487, 0.0
  %v492 = vmax.f32 %v488, 0.0
  %v493 = vmax.f32 %v489, 0.0
  %498 = vrot.lane.b32.xlu0 %v490, 32
  %v499 = vpop.permute.xlu0 %498
  %500 = vrot.lane.b32.xlu0 %v491, 32
  %v501 = vpop.permute.xlu0 %500
  %502 = vrot.lane.b32.xlu0 %v492, 32
  %v503 = vpop.permute.xlu0 %502
  %504 = vrot.lane.b32.xlu0 %v493, 32
  %v505 = vpop.permute.xlu0 %504
  %vm510 = vcmask 523520
  %511 = vst.msk [vmem:[#allocation2] sm:$0xff] %vm510, %v499
  %512 = vst.msk [vmem:[#allocation2 + $0x8] sm:$0xff] %vm510, %v501
  %513 = vst.msk [vmem:[#allocation2 + $0x10] sm:$0xff] %vm510, %v503
  %514 = vst.msk [vmem:[#allocation2 + $0x18] sm:$0xff] %vm510, %v505
  %515 = vset.pattern.permute.xlu0 2
  %516 = vperm.xlu0 %515, %v191
  %v517 = vpop.permute.xlu0 %516
  %519 = vset.pattern.permute.xlu0 2
  %520 = vperm.xlu0 %519, %v194
  %v521 = vpop.permute.xlu0 %520
  %523 = vset.pattern.permute.xlu0 2
  %524 = vperm.xlu0 %523, %v197
  %v525 = vpop.permute.xlu0 %524
  %527 = vset.pattern.permute.xlu0 2
  %528 = vperm.xlu0 %527, %v200
  %v529 = vpop.permute.xlu0 %528
  %v531 = vperm.slane %v234, 2
  %v532 = vadd.f32 %v517, %v531
  %v533 = vadd.f32 %v521, %v531
  %v534 = vadd.f32 %v525, %v531
  %v535 = vadd.f32 %v529, %v531
  %v536 = vmul.f32 %v532, 0.2
  %v537 = vmul.f32 %v533, 0.2
  %v538 = vmul.f32 %v534, 0.2
  %v539 = vmul.f32 %v535, 0.2
  %v540 = vmax.f32 %v532, %v536
  %v541 = vmax.f32 %v533, %v537
  %v542 = vmax.f32 %v534, %v538
  %v543 = vmax.f32 %v535, %v539
  %v544 = vadd.f32 %v540, %v102
  %v545 = vadd.f32 %v541, %v103
  %v546 = vadd.f32 %v542, %v104
  %v547 = vadd.f32 %v543, %v105
  %v548 = vsel %vm131, %v544, -inf
  %549 = vmax.xlane.f32.xlu0 %v548
  %v550 = vpop.xlane.xlu0 %549
  %v551 = vsel %vm131, %v545, -inf
  %552 = vmax.xlane.f32.xlu0 %v551
  %v553 = vpop.xlane.xlu0 %552
  %v554 = vsel %vm131, %v546, -inf
  %555 = vmax.xlane.f32.xlu0 %v554
  %v556 = vpop.xlane.xlu0 %555
  %v557 = vsel %vm131, %v547, -inf
  %558 = vmax.xlane.f32.xlu0 %v557
  %v559 = vpop.xlane.xlu0 %558
  %v560 = vsub.f32 %v544, %v550
  %v561 = vsub.f32 %v545, %v553
  %v562 = vsub.f32 %v546, %v556
  %v563 = vsub.f32 %v547, %v559
  %v564 = vmul.f32 %v560, 1.442695
  %v565 = vpow.pop %v564
  %v566 = vmul.f32 %v561, 1.442695
  %v567 = vpow.pop %v566
  %v568 = vmul.f32 %v562, 1.442695
  %v569 = vpow.pop %v568
  %v570 = vmul.f32 %v563, 1.442695
  %v571 = vpow.pop %v570
  %v572 = vpack.c.bf16 %v567, %v565
  %v573 = vpack.c.bf16 %v571, %v569
  %v574 = vsel %vm131, %v565, 0.0
  %575 = vadd.xlane.f32.xlu0 %v574
  %v576 = vpop.xlane.xlu0 %575
  %v577 = vsel %vm131, %v567, 0.0
  %578 = vadd.xlane.f32.xlu0 %v577
  %v579 = vpop.xlane.xlu0 %578
  %v580 = vsel %vm131, %v569, 0.0
  %581 = vadd.xlane.f32.xlu0 %v580
  %v582 = vpop.xlane.xlu0 %581
  %v583 = vsel %vm131, %v571, 0.0
  %584 = vadd.xlane.f32.xlu0 %v583
  %v585 = vpop.xlane.xlu0 %584
  %v586 = vrcp.pop %v576
  %v587 = vrcp.pop %v579
  %v588 = vrcp.pop %v582
  %v589 = vrcp.pop %v585
  %590 = vrot.lane.b32.xlu0 %v250, 64
  %v591 = vpop.permute.xlu0 %590
  %592 = vrot.lane.b32.xlu0 %v251, 64
  %v593 = vpop.permute.xlu0 %592
  %v597 = vsel %vm131, %v572, 0
  %v600 = vsel %vm131, %v573, 0
  %602 = vmatpush.bf16.msra.mxu0 0
  %603 = vmatpush.bf16.msra.mxu0 0
  %604 = vmatpush.bf16.msra.mxu0 0
  %605 = vmatpush.bf16.msra.mxu0 0
  %606 = vmatpush.bf16.msra.mxu0 0
  %607 = vmatpush.bf16.msra.mxu0 0
  %608 = vmatpush.bf16.msra.mxu0 %v593
  %609 = vmatpush.bf16.msra.mxu0 %v591
  %610 = vmatmul.bf16.gmra.mxu0 %v597
  %v611 = vpop.f32.mrf.mxu0
  %v612 = vadd.f32 0.0, %v611
  %v613 = vpop.f32.mrf.mxu0
  %v614 = vadd.f32 0.0, %v613
  %615 = vmatmul.bf16.gmra.mxu0 %v600
  %v616 = vpop.f32.mrf.mxu0
  %v617 = vadd.f32 0.0, %v616
  %v618 = vpop.f32.mrf.mxu0
  %v619 = vadd.f32 0.0, %v618
  %620 = vdwg.mxu0
  %v621 = vmul.f32 %v612, %v586
  %v622 = vmul.f32 %v614, %v587
  %v623 = vmul.f32 %v617, %v588
  %v624 = vmul.f32 %v619, %v589
  %625 = vrot.lane.b32.xlu0 %v357, 64
  %v626 = vpop.permute.xlu0 %625
  %v628 = vadd.f32 %v621, %v626
  %v629 = vadd.f32 %v622, %v626
  %v630 = vadd.f32 %v623, %v626
  %v631 = vadd.f32 %v624, %v626
  %v632 = vmax.f32 %v628, 0.0
  %v633 = vmax.f32 %v629, 0.0
  %v634 = vmax.f32 %v630, 0.0
  %v635 = vmax.f32 %v631, 0.0
  %640 = vrot.lane.b32.xlu0 %v632, 64
  %v641 = vpop.permute.xlu0 %640
  %642 = vrot.lane.b32.xlu0 %v633, 64
  %v643 = vpop.permute.xlu0 %642
  %644 = vrot.lane.b32.xlu0 %v634, 64
  %v645 = vpop.permute.xlu0 %644
  %646 = vrot.lane.b32.xlu0 %v635, 64
  %v647 = vpop.permute.xlu0 %646
  %vm652 = vcmask 785920
  %653 = vst.msk [vmem:[#allocation2] sm:$0xff] %vm652, %v641
  %654 = vst.msk [vmem:[#allocation2 + $0x8] sm:$0xff] %vm652, %v643
  %655 = vst.msk [vmem:[#allocation2 + $0x10] sm:$0xff] %vm652, %v645
  %656 = vst.msk [vmem:[#allocation2 + $0x18] sm:$0xff] %vm652, %v647
  %657 = vset.pattern.permute.xlu0 3
  %658 = vperm.xlu0 %657, %v191
  %v659 = vpop.permute.xlu0 %658
  %661 = vset.pattern.permute.xlu0 3
  %662 = vperm.xlu0 %661, %v194
  %v663 = vpop.permute.xlu0 %662
  %665 = vset.pattern.permute.xlu0 3
  %666 = vperm.xlu0 %665, %v197
  %v667 = vpop.permute.xlu0 %666
  %669 = vset.pattern.permute.xlu0 3
  %670 = vperm.xlu0 %669, %v200
  %v671 = vpop.permute.xlu0 %670
  %v673 = vperm.slane %v234, 3
  %v674 = vadd.f32 %v659, %v673
  %v675 = vadd.f32 %v663, %v673
  %v676 = vadd.f32 %v667, %v673
  %v677 = vadd.f32 %v671, %v673
  %v678 = vmul.f32 %v674, 0.2
  %v679 = vmul.f32 %v675, 0.2
  %v680 = vmul.f32 %v676, 0.2
  %v681 = vmul.f32 %v677, 0.2
  %v682 = vmax.f32 %v674, %v678
  %v683 = vmax.f32 %v675, %v679
  %v684 = vmax.f32 %v676, %v680
  %v685 = vmax.f32 %v677, %v681
  %v686 = vadd.f32 %v682, %v102
  %v687 = vadd.f32 %v683, %v103
  %v688 = vadd.f32 %v684, %v104
  %v689 = vadd.f32 %v685, %v105
  %v690 = vsel %vm131, %v686, -inf
  %691 = vmax.xlane.f32.xlu0 %v690
  %v692 = vpop.xlane.xlu0 %691
  %v693 = vsel %vm131, %v687, -inf
  %694 = vmax.xlane.f32.xlu0 %v693
  %v695 = vpop.xlane.xlu0 %694
  %v696 = vsel %vm131, %v688, -inf
  %697 = vmax.xlane.f32.xlu0 %v696
  %v698 = vpop.xlane.xlu0 %697
  %v699 = vsel %vm131, %v689, -inf
  %700 = vmax.xlane.f32.xlu0 %v699
  %v701 = vpop.xlane.xlu0 %700
  %v702 = vsub.f32 %v686, %v692
  %v703 = vsub.f32 %v687, %v695
  %v704 = vsub.f32 %v688, %v698
  %v705 = vsub.f32 %v689, %v701
  %v706 = vmul.f32 %v702, 1.442695
  %v707 = vpow.pop %v706
  %v708 = vmul.f32 %v703, 1.442695
  %v709 = vpow.pop %v708
  %v710 = vmul.f32 %v704, 1.442695
  %v711 = vpow.pop %v710
  %v712 = vmul.f32 %v705, 1.442695
  %v713 = vpow.pop %v712
  %v714 = vpack.c.bf16 %v709, %v707
  %v715 = vpack.c.bf16 %v713, %v711
  %v716 = vsel %vm131, %v707, 0.0
  %717 = vadd.xlane.f32.xlu0 %v716
  %v718 = vpop.xlane.xlu0 %717
  %v719 = vsel %vm131, %v709, 0.0
  %720 = vadd.xlane.f32.xlu0 %v719
  %v721 = vpop.xlane.xlu0 %720
  %v722 = vsel %vm131, %v711, 0.0
  %723 = vadd.xlane.f32.xlu0 %v722
  %v724 = vpop.xlane.xlu0 %723
  %v725 = vsel %vm131, %v713, 0.0
  %726 = vadd.xlane.f32.xlu0 %v725
  %v727 = vpop.xlane.xlu0 %726
  %v728 = vrcp.pop %v718
  %v729 = vrcp.pop %v721
  %v730 = vrcp.pop %v724
  %v731 = vrcp.pop %v727
  %732 = vrot.lane.b32.xlu0 %v250, 32
  %v733 = vpop.permute.xlu0 %732
  %734 = vrot.lane.b32.xlu0 %v251, 32
  %v735 = vpop.permute.xlu0 %734
  %v739 = vsel %vm131, %v714, 0
  %v742 = vsel %vm131, %v715, 0
  %744 = vmatpush.bf16.msra.mxu0 0
  %745 = vmatpush.bf16.msra.mxu0 0
  %746 = vmatpush.bf16.msra.mxu0 0
  %747 = vmatpush.bf16.msra.mxu0 0
  %748 = vmatpush.bf16.msra.mxu0 0
  %749 = vmatpush.bf16.msra.mxu0 0
  %750 = vmatpush.bf16.msra.mxu0 %v735
  %751 = vmatpush.bf16.msra.mxu0 %v733
  %752 = vmatmul.bf16.gmra.mxu0 %v739
  %v753 = vpop.f32.mrf.mxu0
  %v754 = vadd.f32 0.0, %v753
  %v755 = vpop.f32.mrf.mxu0
  %v756 = vadd.f32 0.0, %v755
  %757 = vmatmul.bf16.gmra.mxu0 %v742
  %v758 = vpop.f32.mrf.mxu0
  %v759 = vadd.f32 0.0, %v758
  %v760 = vpop.f32.mrf.mxu0
  %v761 = vadd.f32 0.0, %v760
  %762 = vdwg.mxu0
  %v763 = vmul.f32 %v754, %v728
  %v764 = vmul.f32 %v756, %v729
  %v765 = vmul.f32 %v759, %v730
  %v766 = vmul.f32 %v761, %v731
  %767 = vrot.lane.b32.xlu0 %v357, 32
  %v768 = vpop.permute.xlu0 %767
  %v770 = vadd.f32 %v763, %v768
  %v771 = vadd.f32 %v764, %v768
  %v772 = vadd.f32 %v765, %v768
  %v773 = vadd.f32 %v766, %v768
  %v774 = vmax.f32 %v770, 0.0
  %v775 = vmax.f32 %v771, 0.0
  %v776 = vmax.f32 %v772, 0.0
  %v777 = vmax.f32 %v773, 0.0
  %782 = vrot.lane.b32.xlu0 %v774, 96
  %v783 = vpop.permute.xlu0 %782
  %784 = vrot.lane.b32.xlu0 %v775, 96
  %v785 = vpop.permute.xlu0 %784
  %786 = vrot.lane.b32.xlu0 %v776, 96
  %v787 = vpop.permute.xlu0 %786
  %788 = vrot.lane.b32.xlu0 %v777, 96
  %v789 = vpop.permute.xlu0 %788
  %vm794 = vcmask 1048320
  %795 = vst.msk [vmem:[#allocation2] sm:$0xff] %vm794, %v783
  %796 = vst.msk [vmem:[#allocation2 + $0x8] sm:$0xff] %vm794, %v785
  %797 = vst.msk [vmem:[#allocation2 + $0x10] sm:$0xff] %vm794, %v787
  %798 = vst.msk [vmem:[#allocation2 + $0x18] sm:$0xff] %vm794, %v789
  %v799 = vld [vmem:[#allocation2] sm:$0xff]
  %v800 = vld [vmem:[#allocation2 + $0x8] sm:$0xff]
  %v801 = vld [vmem:[#allocation2 + $0x10] sm:$0xff]
  %v802 = vld [vmem:[#allocation2 + $0x18] sm:$0xff]
  %803 = vmatpush.msra.mxu0 %v130
  %804 = vmatpush.msra.mxu0 %v129
  %805 = vmatpush.msra.mxu0 %v128
  %806 = vmatpush.msra.mxu0 %v127
  %807 = vmatpush.msra.mxu0 %v126
  %808 = vmatpush.msra.mxu0 %v125
  %809 = vmatpush.msra.mxu0 %v124
  %810 = vmatpush.msra.mxu0 %v123
  %811 = vmatpush.msra.mxu0 %v122
  %812 = vmatpush.msra.mxu0 %v121
  %813 = vmatpush.msra.mxu0 %v120
  %814 = vmatpush.msra.mxu0 %v119
  %815 = vmatpush.msra.mxu0 %v118
  %816 = vmatpush.msra.mxu0 %v117
  %817 = vmatpush.msra.mxu0 %v116
  %818 = vmatpush.msra.mxu0 %v115
  %819 = vmatmul.f32.gmra.mxu0 %v799
  %v820 = vpop.f32.mrf.mxu0
  %v821 = vadd.f32 0.0, %v820
  %822 = vmatmul.f32.gmra.mxu0 %v800
  %v823 = vpop.f32.mrf.mxu0
  %v824 = vadd.f32 0.0, %v823
  %825 = vmatmul.f32.gmra.mxu0 %v801
  %v826 = vpop.f32.mrf.mxu0
  %v827 = vadd.f32 0.0, %v826
  %828 = vmatmul.f32.gmra.mxu0 %v802
  %v829 = vpop.f32.mrf.mxu0
  %v830 = vadd.f32 0.0, %v829
  %831 = vdwg.mxu0
  %v832 = vadd.f32 %v85, %v821
  %v833 = vadd.f32 %v86, %v824
  %v834 = vadd.f32 %v87, %v827
  %v835 = vadd.f32 %v88, %v830
  %v837 = vsel %vm131, %v832, 0
  %v840 = vsel %vm131, %v833, 0
  %v843 = vsel %vm131, %v834, 0
  %v846 = vsel %vm131, %v835, 0
  %848 = vmatpush.msra.mxu0 0.0
  %849 = vmatpush.msra.mxu0 0.0
  %850 = vmatpush.msra.mxu0 0.0
  %851 = vmatpush.msra.mxu0 0.0
  %852 = vmatpush.msra.mxu0 0.0
  %853 = vmatpush.msra.mxu0 0.0
  %854 = vmatpush.msra.mxu0 0.0
  %855 = vmatpush.msra.mxu0 0.0
  %856 = vmatpush.msra.mxu0 0.0
  %857 = vmatpush.msra.mxu0 0.0
  %858 = vmatpush.msra.mxu0 0.0
  %859 = vmatpush.msra.mxu0 0.0
  %860 = vmatpush.msra.mxu0 %v112
  %861 = vmatpush.msra.mxu0 %v110
  %862 = vmatpush.msra.mxu0 %v108
  %863 = vmatpush.msra.mxu0 %v106
  %864 = vmatmul.f32.gmra.mxu0 %v837
  %v865 = vpop.f32.mrf.mxu0
  %v866 = vadd.f32 0.0, %v865
  %867 = vmatmul.f32.gmra.mxu0 %v840
  %v868 = vpop.f32.mrf.mxu0
  %v869 = vadd.f32 0.0, %v868
  %870 = vmatmul.f32.gmra.mxu0 %v843
  %v871 = vpop.f32.mrf.mxu0
  %v872 = vadd.f32 0.0, %v871
  %873 = vmatmul.f32.gmra.mxu0 %v846
  %v874 = vpop.f32.mrf.mxu0
  %v875 = vadd.f32 0.0, %v874
  %876 = vdwg.mxu0
  %877 = vmatpush.msra.mxu0 0.0
  %878 = vmatpush.msra.mxu0 0.0
  %879 = vmatpush.msra.mxu0 0.0
  %880 = vmatpush.msra.mxu0 0.0
  %881 = vmatpush.msra.mxu0 0.0
  %882 = vmatpush.msra.mxu0 0.0
  %883 = vmatpush.msra.mxu0 0.0
  %884 = vmatpush.msra.mxu0 0.0
  %885 = vmatpush.msra.mxu0 0.0
  %886 = vmatpush.msra.mxu0 0.0
  %887 = vmatpush.msra.mxu0 0.0
  %888 = vmatpush.msra.mxu0 0.0
  %889 = vmatpush.msra.mxu0 %v113
  %890 = vmatpush.msra.mxu0 %v111
  %891 = vmatpush.msra.mxu0 %v109
  %892 = vmatpush.msra.mxu0 %v107
  %893 = vmatmul.f32.gmra.mxu0 %v837
  %v894 = vpop.f32.mrf.mxu0
  %v895 = vadd.f32 0.0, %v894
  %896 = vmatmul.f32.gmra.mxu0 %v840
  %v897 = vpop.f32.mrf.mxu0
  %v898 = vadd.f32 0.0, %v897
  %899 = vmatmul.f32.gmra.mxu0 %v843
  %v900 = vpop.f32.mrf.mxu0
  %v901 = vadd.f32 0.0, %v900
  %902 = vmatmul.f32.gmra.mxu0 %v846
  %v903 = vpop.f32.mrf.mxu0
  %v904 = vadd.f32 0.0, %v903
  %905 = vdwg.mxu0
  %910 = vrot.lane.b32.xlu0 %v895, 124
  %v911 = vpop.permute.xlu0 %910
  %912 = vrot.lane.b32.xlu0 %v898, 124
  %v913 = vpop.permute.xlu0 %912
  %914 = vrot.lane.b32.xlu0 %v901, 124
  %v915 = vpop.permute.xlu0 %914
  %916 = vrot.lane.b32.xlu0 %v904, 124
  %v917 = vpop.permute.xlu0 %916
  %922 = vxpose.xlu0.b32.start [1/16] %v911, 128
  %923 = vxpose.xlu0.b32.cont [2/16] %v913, 128
  %924 = vxpose.xlu0.b32.cont [3/16] %v915, 128
  %925 = vxpose.xlu0.b32.cont [4/16] %v917, 128
  %926 = vxpose.xlu0.b32.cont [5/16] 0.0, 128
  %927 = vxpose.xlu0.b32.cont [6/16] 0.0, 128
  %928 = vxpose.xlu0.b32.cont [7/16] 0.0, 128
  %929 = vxpose.xlu0.b32.cont [8/16] 0.0, 128
  %930 = vxpose.xlu0.b32.cont [9/16] 0.0, 128
  %931 = vxpose.xlu0.b32.cont [10/16] 0.0, 128
  %932 = vxpose.xlu0.b32.cont [11/16] 0.0, 128
  %933 = vxpose.xlu0.b32.cont [12/16] 0.0, 128
  %934 = vxpose.xlu0.b32.cont [13/16] 0.0, 128
  %935 = vxpose.xlu0.b32.cont [14/16] 0.0, 128
  %936 = vxpose.xlu0.b32.cont [15/16] 0.0, 128
  %937 = vxpose.xlu0.b32.end [16/16] 0.0, 128
  %v938 = vpop.trf.xlu0
  %v939 = vpop.trf.xlu0
  %v940 = vpop.trf.xlu0
  %v941 = vpop.trf.xlu0
  %v942 = vpop.trf.xlu0
  %v943 = vpop.trf.xlu0
  %v944 = vpop.trf.xlu0
  %v945 = vpop.trf.xlu0
  %v946 = vpop.trf.xlu0
  %v947 = vpop.trf.xlu0
  %v948 = vpop.trf.xlu0
  %v949 = vpop.trf.xlu0
  %v950 = vpop.trf.xlu0
  %v951 = vpop.trf.xlu0
  %v952 = vpop.trf.xlu0
  %v953 = vpop.trf.xlu0
  %v954 = vpack.c.bf16 %v869, %v866
  %v955 = vpack.c.bf16 %v875, %v872
  %956 = vset.pattern.permute.xlu0 0
  %957 = vperm.xlu0 %956, %v895
  %v958 = vpop.permute.xlu0 %957
  %960 = vset.pattern.permute.xlu0 0
  %961 = vperm.xlu0 %960, %v898
  %v962 = vpop.permute.xlu0 %961
  %964 = vset.pattern.permute.xlu0 0
  %965 = vperm.xlu0 %964, %v901
  %v966 = vpop.permute.xlu0 %965
  %968 = vset.pattern.permute.xlu0 0
  %969 = vperm.xlu0 %968, %v904
  %v970 = vpop.permute.xlu0 %969
  %v972 = vperm.slane %v938, 0
  %v973 = vadd.f32 %v958, %v972
  %v974 = vadd.f32 %v962, %v972
  %v975 = vadd.f32 %v966, %v972
  %v976 = vadd.f32 %v970, %v972
  %v977 = vmul.f32 %v973, 0.2
  %v978 = vmul.f32 %v974, 0.2
  %v979 = vmul.f32 %v975, 0.2
  %v980 = vmul.f32 %v976, 0.2
  %v981 = vmax.f32 %v973, %v977
  %v982 = vmax.f32 %v974, %v978
  %v983 = vmax.f32 %v975, %v979
  %v984 = vmax.f32 %v976, %v980
  %v985 = vadd.f32 %v981, %v102
  %v986 = vadd.f32 %v982, %v103
  %v987 = vadd.f32 %v983, %v104
  %v988 = vadd.f32 %v984, %v105
  %v989 = vsel %vm131, %v985, -inf
  %990 = vmax.xlane.f32.xlu0 %v989
  %v991 = vpop.xlane.xlu0 %990
  %v992 = vsel %vm131, %v986, -inf
  %993 = vmax.xlane.f32.xlu0 %v992
  %v994 = vpop.xlane.xlu0 %993
  %v995 = vsel %vm131, %v987, -inf
  %996 = vmax.xlane.f32.xlu0 %v995
  %v997 = vpop.xlane.xlu0 %996
  %v998 = vsel %vm131, %v988, -inf
  %999 = vmax.xlane.f32.xlu0 %v998
  %v1000 = vpop.xlane.xlu0 %999
  %v1001 = vsub.f32 %v985, %v991
  %v1002 = vsub.f32 %v986, %v994
  %v1003 = vsub.f32 %v987, %v997
  %v1004 = vsub.f32 %v988, %v1000
  %v1005 = vmul.f32 %v1001, 1.442695
  %v1006 = vpow.pop %v1005
  %v1007 = vmul.f32 %v1002, 1.442695
  %v1008 = vpow.pop %v1007
  %v1009 = vmul.f32 %v1003, 1.442695
  %v1010 = vpow.pop %v1009
  %v1011 = vmul.f32 %v1004, 1.442695
  %v1012 = vpow.pop %v1011
  %v1013 = vpack.c.bf16 %v1008, %v1006
  %v1014 = vpack.c.bf16 %v1012, %v1010
  %v1015 = vsel %vm131, %v1006, 0.0
  %1016 = vadd.xlane.f32.xlu0 %v1015
  %v1017 = vpop.xlane.xlu0 %1016
  %v1018 = vsel %vm131, %v1008, 0.0
  %1019 = vadd.xlane.f32.xlu0 %v1018
  %v1020 = vpop.xlane.xlu0 %1019
  %v1021 = vsel %vm131, %v1010, 0.0
  %1022 = vadd.xlane.f32.xlu0 %v1021
  %v1023 = vpop.xlane.xlu0 %1022
  %v1024 = vsel %vm131, %v1012, 0.0
  %1025 = vadd.xlane.f32.xlu0 %v1024
  %v1026 = vpop.xlane.xlu0 %1025
  %v1027 = vrcp.pop %v1017
  %v1028 = vrcp.pop %v1020
  %v1029 = vrcp.pop %v1023
  %v1030 = vrcp.pop %v1026
  %v1032 = vsel %vm131, %v1013, 0
  %v1035 = vsel %vm131, %v1014, 0
  %1037 = vmatpush.bf16.msra.mxu0 0
  %1038 = vmatpush.bf16.msra.mxu0 0
  %1039 = vmatpush.bf16.msra.mxu0 0
  %1040 = vmatpush.bf16.msra.mxu0 0
  %1041 = vmatpush.bf16.msra.mxu0 0
  %1042 = vmatpush.bf16.msra.mxu0 0
  %1043 = vmatpush.bf16.msra.mxu0 %v955
  %1044 = vmatpush.bf16.msra.mxu0 %v954
  %1045 = vmatmul.bf16.gmra.mxu0 %v1032
  %v1046 = vpop.f32.mrf.mxu0
  %v1047 = vadd.f32 0.0, %v1046
  %v1048 = vpop.f32.mrf.mxu0
  %v1049 = vadd.f32 0.0, %v1048
  %1050 = vmatmul.bf16.gmra.mxu0 %v1035
  %v1051 = vpop.f32.mrf.mxu0
  %v1052 = vadd.f32 0.0, %v1051
  %v1053 = vpop.f32.mrf.mxu0
  %v1054 = vadd.f32 0.0, %v1053
  %1055 = vdwg.mxu0
  %v1056 = vmul.f32 %v1047, %v1027
  %v1057 = vmul.f32 %v1049, %v1028
  %v1058 = vmul.f32 %v1052, %v1029
  %v1059 = vmul.f32 %v1054, %v1030
  %v1060 = vadd.f32 %v1056, %v357
  %v1061 = vadd.f32 %v1057, %v357
  %v1062 = vadd.f32 %v1058, %v357
  %v1063 = vadd.f32 %v1059, %v357
  %v1064 = vmax.f32 %v1060, 0.0
  %v1065 = vmax.f32 %v1061, 0.0
  %v1066 = vmax.f32 %v1062, 0.0
  %v1067 = vmax.f32 %v1063, 0.0
  %1068 = vst.msk [vmem:[#allocation2] sm:$0xff] %vm131, %v1064
  %1069 = vst.msk [vmem:[#allocation2 + $0x8] sm:$0xff] %vm131, %v1065
  %1070 = vst.msk [vmem:[#allocation2 + $0x10] sm:$0xff] %vm131, %v1066
  %1071 = vst.msk [vmem:[#allocation2 + $0x18] sm:$0xff] %vm131, %v1067
  %1072 = vset.pattern.permute.xlu0 1
  %1073 = vperm.xlu0 %1072, %v895
  %v1074 = vpop.permute.xlu0 %1073
  %1076 = vset.pattern.permute.xlu0 1
  %1077 = vperm.xlu0 %1076, %v898
  %v1078 = vpop.permute.xlu0 %1077
  %1080 = vset.pattern.permute.xlu0 1
  %1081 = vperm.xlu0 %1080, %v901
  %v1082 = vpop.permute.xlu0 %1081
  %1084 = vset.pattern.permute.xlu0 1
  %1085 = vperm.xlu0 %1084, %v904
  %v1086 = vpop.permute.xlu0 %1085
  %v1088 = vperm.slane %v938, 1
  %v1089 = vadd.f32 %v1074, %v1088
  %v1090 = vadd.f32 %v1078, %v1088
  %v1091 = vadd.f32 %v1082, %v1088
  %v1092 = vadd.f32 %v1086, %v1088
  %v1093 = vmul.f32 %v1089, 0.2
  %v1094 = vmul.f32 %v1090, 0.2
  %v1095 = vmul.f32 %v1091, 0.2
  %v1096 = vmul.f32 %v1092, 0.2
  %v1097 = vmax.f32 %v1089, %v1093
  %v1098 = vmax.f32 %v1090, %v1094
  %v1099 = vmax.f32 %v1091, %v1095
  %v1100 = vmax.f32 %v1092, %v1096
  %v1101 = vadd.f32 %v1097, %v102
  %v1102 = vadd.f32 %v1098, %v103
  %v1103 = vadd.f32 %v1099, %v104
  %v1104 = vadd.f32 %v1100, %v105
  %v1105 = vsel %vm131, %v1101, -inf
  %1106 = vmax.xlane.f32.xlu0 %v1105
  %v1107 = vpop.xlane.xlu0 %1106
  %v1108 = vsel %vm131, %v1102, -inf
  %1109 = vmax.xlane.f32.xlu0 %v1108
  %v1110 = vpop.xlane.xlu0 %1109
  %v1111 = vsel %vm131, %v1103, -inf
  %1112 = vmax.xlane.f32.xlu0 %v1111
  %v1113 = vpop.xlane.xlu0 %1112
  %v1114 = vsel %vm131, %v1104, -inf
  %1115 = vmax.xlane.f32.xlu0 %v1114
  %v1116 = vpop.xlane.xlu0 %1115
  %v1117 = vsub.f32 %v1101, %v1107
  %v1118 = vsub.f32 %v1102, %v1110
  %v1119 = vsub.f32 %v1103, %v1113
  %v1120 = vsub.f32 %v1104, %v1116
  %v1121 = vmul.f32 %v1117, 1.442695
  %v1122 = vpow.pop %v1121
  %v1123 = vmul.f32 %v1118, 1.442695
  %v1124 = vpow.pop %v1123
  %v1125 = vmul.f32 %v1119, 1.442695
  %v1126 = vpow.pop %v1125
  %v1127 = vmul.f32 %v1120, 1.442695
  %v1128 = vpow.pop %v1127
  %v1129 = vpack.c.bf16 %v1124, %v1122
  %v1130 = vpack.c.bf16 %v1128, %v1126
  %v1131 = vsel %vm131, %v1122, 0.0
  %1132 = vadd.xlane.f32.xlu0 %v1131
  %v1133 = vpop.xlane.xlu0 %1132
  %v1134 = vsel %vm131, %v1124, 0.0
  %1135 = vadd.xlane.f32.xlu0 %v1134
  %v1136 = vpop.xlane.xlu0 %1135
  %v1137 = vsel %vm131, %v1126, 0.0
  %1138 = vadd.xlane.f32.xlu0 %v1137
  %v1139 = vpop.xlane.xlu0 %1138
  %v1140 = vsel %vm131, %v1128, 0.0
  %1141 = vadd.xlane.f32.xlu0 %v1140
  %v1142 = vpop.xlane.xlu0 %1141
  %v1143 = vrcp.pop %v1133
  %v1144 = vrcp.pop %v1136
  %v1145 = vrcp.pop %v1139
  %v1146 = vrcp.pop %v1142
  %1149 = vrot.lane.b32.xlu0 %v954, 96
  %v1150 = vpop.permute.xlu0 %1149
  %1151 = vrot.lane.b32.xlu0 %v955, 96
  %v1152 = vpop.permute.xlu0 %1151
  %v1156 = vsel %vm131, %v1129, 0
  %v1159 = vsel %vm131, %v1130, 0
  %1161 = vmatpush.bf16.msra.mxu0 0
  %1162 = vmatpush.bf16.msra.mxu0 0
  %1163 = vmatpush.bf16.msra.mxu0 0
  %1164 = vmatpush.bf16.msra.mxu0 0
  %1165 = vmatpush.bf16.msra.mxu0 0
  %1166 = vmatpush.bf16.msra.mxu0 0
  %1167 = vmatpush.bf16.msra.mxu0 %v1152
  %1168 = vmatpush.bf16.msra.mxu0 %v1150
  %1169 = vmatmul.bf16.gmra.mxu0 %v1156
  %v1170 = vpop.f32.mrf.mxu0
  %v1171 = vadd.f32 0.0, %v1170
  %v1172 = vpop.f32.mrf.mxu0
  %v1173 = vadd.f32 0.0, %v1172
  %1174 = vmatmul.bf16.gmra.mxu0 %v1159
  %v1175 = vpop.f32.mrf.mxu0
  %v1176 = vadd.f32 0.0, %v1175
  %v1177 = vpop.f32.mrf.mxu0
  %v1178 = vadd.f32 0.0, %v1177
  %1179 = vdwg.mxu0
  %v1180 = vmul.f32 %v1171, %v1143
  %v1181 = vmul.f32 %v1173, %v1144
  %v1182 = vmul.f32 %v1176, %v1145
  %v1183 = vmul.f32 %v1178, %v1146
  %v1184 = vadd.f32 %v1180, %v484
  %v1185 = vadd.f32 %v1181, %v484
  %v1186 = vadd.f32 %v1182, %v484
  %v1187 = vadd.f32 %v1183, %v484
  %v1188 = vmax.f32 %v1184, 0.0
  %v1189 = vmax.f32 %v1185, 0.0
  %v1190 = vmax.f32 %v1186, 0.0
  %v1191 = vmax.f32 %v1187, 0.0
  %1196 = vrot.lane.b32.xlu0 %v1188, 32
  %v1197 = vpop.permute.xlu0 %1196
  %1198 = vrot.lane.b32.xlu0 %v1189, 32
  %v1199 = vpop.permute.xlu0 %1198
  %1200 = vrot.lane.b32.xlu0 %v1190, 32
  %v1201 = vpop.permute.xlu0 %1200
  %1202 = vrot.lane.b32.xlu0 %v1191, 32
  %v1203 = vpop.permute.xlu0 %1202
  %1208 = vst.msk [vmem:[#allocation2] sm:$0xff] %vm510, %v1197
  %1209 = vst.msk [vmem:[#allocation2 + $0x8] sm:$0xff] %vm510, %v1199
  %1210 = vst.msk [vmem:[#allocation2 + $0x10] sm:$0xff] %vm510, %v1201
  %1211 = vst.msk [vmem:[#allocation2 + $0x18] sm:$0xff] %vm510, %v1203
  %1212 = vset.pattern.permute.xlu0 2
  %1213 = vperm.xlu0 %1212, %v895
  %v1214 = vpop.permute.xlu0 %1213
  %1216 = vset.pattern.permute.xlu0 2
  %1217 = vperm.xlu0 %1216, %v898
  %v1218 = vpop.permute.xlu0 %1217
  %1220 = vset.pattern.permute.xlu0 2
  %1221 = vperm.xlu0 %1220, %v901
  %v1222 = vpop.permute.xlu0 %1221
  %1224 = vset.pattern.permute.xlu0 2
  %1225 = vperm.xlu0 %1224, %v904
  %v1226 = vpop.permute.xlu0 %1225
  %v1228 = vperm.slane %v938, 2
  %v1229 = vadd.f32 %v1214, %v1228
  %v1230 = vadd.f32 %v1218, %v1228
  %v1231 = vadd.f32 %v1222, %v1228
  %v1232 = vadd.f32 %v1226, %v1228
  %v1233 = vmul.f32 %v1229, 0.2
  %v1234 = vmul.f32 %v1230, 0.2
  %v1235 = vmul.f32 %v1231, 0.2
  %v1236 = vmul.f32 %v1232, 0.2
  %v1237 = vmax.f32 %v1229, %v1233
  %v1238 = vmax.f32 %v1230, %v1234
  %v1239 = vmax.f32 %v1231, %v1235
  %v1240 = vmax.f32 %v1232, %v1236
  %v1241 = vadd.f32 %v1237, %v102
  %v1242 = vadd.f32 %v1238, %v103
  %v1243 = vadd.f32 %v1239, %v104
  %v1244 = vadd.f32 %v1240, %v105
  %v1245 = vsel %vm131, %v1241, -inf
  %1246 = vmax.xlane.f32.xlu0 %v1245
  %v1247 = vpop.xlane.xlu0 %1246
  %v1248 = vsel %vm131, %v1242, -inf
  %1249 = vmax.xlane.f32.xlu0 %v1248
  %v1250 = vpop.xlane.xlu0 %1249
  %v1251 = vsel %vm131, %v1243, -inf
  %1252 = vmax.xlane.f32.xlu0 %v1251
  %v1253 = vpop.xlane.xlu0 %1252
  %v1254 = vsel %vm131, %v1244, -inf
  %1255 = vmax.xlane.f32.xlu0 %v1254
  %v1256 = vpop.xlane.xlu0 %1255
  %v1257 = vsub.f32 %v1241, %v1247
  %v1258 = vsub.f32 %v1242, %v1250
  %v1259 = vsub.f32 %v1243, %v1253
  %v1260 = vsub.f32 %v1244, %v1256
  %v1261 = vmul.f32 %v1257, 1.442695
  %v1262 = vpow.pop %v1261
  %v1263 = vmul.f32 %v1258, 1.442695
  %v1264 = vpow.pop %v1263
  %v1265 = vmul.f32 %v1259, 1.442695
  %v1266 = vpow.pop %v1265
  %v1267 = vmul.f32 %v1260, 1.442695
  %v1268 = vpow.pop %v1267
  %v1269 = vpack.c.bf16 %v1264, %v1262
  %v1270 = vpack.c.bf16 %v1268, %v1266
  %v1271 = vsel %vm131, %v1262, 0.0
  %1272 = vadd.xlane.f32.xlu0 %v1271
  %v1273 = vpop.xlane.xlu0 %1272
  %v1274 = vsel %vm131, %v1264, 0.0
  %1275 = vadd.xlane.f32.xlu0 %v1274
  %v1276 = vpop.xlane.xlu0 %1275
  %v1277 = vsel %vm131, %v1266, 0.0
  %1278 = vadd.xlane.f32.xlu0 %v1277
  %v1279 = vpop.xlane.xlu0 %1278
  %v1280 = vsel %vm131, %v1268, 0.0
  %1281 = vadd.xlane.f32.xlu0 %v1280
  %v1282 = vpop.xlane.xlu0 %1281
  %v1283 = vrcp.pop %v1273
  %v1284 = vrcp.pop %v1276
  %v1285 = vrcp.pop %v1279
  %v1286 = vrcp.pop %v1282
  %1287 = vrot.lane.b32.xlu0 %v954, 64
  %v1288 = vpop.permute.xlu0 %1287
  %1289 = vrot.lane.b32.xlu0 %v955, 64
  %v1290 = vpop.permute.xlu0 %1289
  %v1294 = vsel %vm131, %v1269, 0
  %v1297 = vsel %vm131, %v1270, 0
  %1299 = vmatpush.bf16.msra.mxu0 0
  %1300 = vmatpush.bf16.msra.mxu0 0
  %1301 = vmatpush.bf16.msra.mxu0 0
  %1302 = vmatpush.bf16.msra.mxu0 0
  %1303 = vmatpush.bf16.msra.mxu0 0
  %1304 = vmatpush.bf16.msra.mxu0 0
  %1305 = vmatpush.bf16.msra.mxu0 %v1290
  %1306 = vmatpush.bf16.msra.mxu0 %v1288
  %1307 = vmatmul.bf16.gmra.mxu0 %v1294
  %v1308 = vpop.f32.mrf.mxu0
  %v1309 = vadd.f32 0.0, %v1308
  %v1310 = vpop.f32.mrf.mxu0
  %v1311 = vadd.f32 0.0, %v1310
  %1312 = vmatmul.bf16.gmra.mxu0 %v1297
  %v1313 = vpop.f32.mrf.mxu0
  %v1314 = vadd.f32 0.0, %v1313
  %v1315 = vpop.f32.mrf.mxu0
  %v1316 = vadd.f32 0.0, %v1315
  %1317 = vdwg.mxu0
  %v1318 = vmul.f32 %v1309, %v1283
  %v1319 = vmul.f32 %v1311, %v1284
  %v1320 = vmul.f32 %v1314, %v1285
  %v1321 = vmul.f32 %v1316, %v1286
  %v1322 = vadd.f32 %v1318, %v626
  %v1323 = vadd.f32 %v1319, %v626
  %v1324 = vadd.f32 %v1320, %v626
  %v1325 = vadd.f32 %v1321, %v626
  %v1326 = vmax.f32 %v1322, 0.0
  %v1327 = vmax.f32 %v1323, 0.0
  %v1328 = vmax.f32 %v1324, 0.0
  %v1329 = vmax.f32 %v1325, 0.0
  %1334 = vrot.lane.b32.xlu0 %v1326, 64
  %v1335 = vpop.permute.xlu0 %1334
  %1336 = vrot.lane.b32.xlu0 %v1327, 64
  %v1337 = vpop.permute.xlu0 %1336
  %1338 = vrot.lane.b32.xlu0 %v1328, 64
  %v1339 = vpop.permute.xlu0 %1338
  %1340 = vrot.lane.b32.xlu0 %v1329, 64
  %v1341 = vpop.permute.xlu0 %1340
  %1346 = vst.msk [vmem:[#allocation2] sm:$0xff] %vm652, %v1335
  %1347 = vst.msk [vmem:[#allocation2 + $0x8] sm:$0xff] %vm652, %v1337
  %1348 = vst.msk [vmem:[#allocation2 + $0x10] sm:$0xff] %vm652, %v1339
  %1349 = vst.msk [vmem:[#allocation2 + $0x18] sm:$0xff] %vm652, %v1341
  %1350 = vset.pattern.permute.xlu0 3
  %1351 = vperm.xlu0 %1350, %v895
  %v1352 = vpop.permute.xlu0 %1351
  %1354 = vset.pattern.permute.xlu0 3
  %1355 = vperm.xlu0 %1354, %v898
  %v1356 = vpop.permute.xlu0 %1355
  %1358 = vset.pattern.permute.xlu0 3
  %1359 = vperm.xlu0 %1358, %v901
  %v1360 = vpop.permute.xlu0 %1359
  %1362 = vset.pattern.permute.xlu0 3
  %1363 = vperm.xlu0 %1362, %v904
  %v1364 = vpop.permute.xlu0 %1363
  %v1366 = vperm.slane %v938, 3
  %v1367 = vadd.f32 %v1352, %v1366
  %v1368 = vadd.f32 %v1356, %v1366
  %v1369 = vadd.f32 %v1360, %v1366
  %v1370 = vadd.f32 %v1364, %v1366
  %v1371 = vmul.f32 %v1367, 0.2
  %v1372 = vmul.f32 %v1368, 0.2
  %v1373 = vmul.f32 %v1369, 0.2
  %v1374 = vmul.f32 %v1370, 0.2
  %v1375 = vmax.f32 %v1367, %v1371
  %v1376 = vmax.f32 %v1368, %v1372
  %v1377 = vmax.f32 %v1369, %v1373
  %v1378 = vmax.f32 %v1370, %v1374
  %v1379 = vadd.f32 %v1375, %v102
  %v1380 = vadd.f32 %v1376, %v103
  %v1381 = vadd.f32 %v1377, %v104
  %v1382 = vadd.f32 %v1378, %v105
  %v1383 = vsel %vm131, %v1379, -inf
  %1384 = vmax.xlane.f32.xlu0 %v1383
  %v1385 = vpop.xlane.xlu0 %1384
  %v1386 = vsel %vm131, %v1380, -inf
  %1387 = vmax.xlane.f32.xlu0 %v1386
  %v1388 = vpop.xlane.xlu0 %1387
  %v1389 = vsel %vm131, %v1381, -inf
  %1390 = vmax.xlane.f32.xlu0 %v1389
  %v1391 = vpop.xlane.xlu0 %1390
  %v1392 = vsel %vm131, %v1382, -inf
  %1393 = vmax.xlane.f32.xlu0 %v1392
  %v1394 = vpop.xlane.xlu0 %1393
  %v1395 = vsub.f32 %v1379, %v1385
  %v1396 = vsub.f32 %v1380, %v1388
  %v1397 = vsub.f32 %v1381, %v1391
  %v1398 = vsub.f32 %v1382, %v1394
  %v1399 = vmul.f32 %v1395, 1.442695
  %v1400 = vpow.pop %v1399
  %v1401 = vmul.f32 %v1396, 1.442695
  %v1402 = vpow.pop %v1401
  %v1403 = vmul.f32 %v1397, 1.442695
  %v1404 = vpow.pop %v1403
  %v1405 = vmul.f32 %v1398, 1.442695
  %v1406 = vpow.pop %v1405
  %v1407 = vpack.c.bf16 %v1402, %v1400
  %v1408 = vpack.c.bf16 %v1406, %v1404
  %v1409 = vsel %vm131, %v1400, 0.0
  %1410 = vadd.xlane.f32.xlu0 %v1409
  %v1411 = vpop.xlane.xlu0 %1410
  %v1412 = vsel %vm131, %v1402, 0.0
  %1413 = vadd.xlane.f32.xlu0 %v1412
  %v1414 = vpop.xlane.xlu0 %1413
  %v1415 = vsel %vm131, %v1404, 0.0
  %1416 = vadd.xlane.f32.xlu0 %v1415
  %v1417 = vpop.xlane.xlu0 %1416
  %v1418 = vsel %vm131, %v1406, 0.0
  %1419 = vadd.xlane.f32.xlu0 %v1418
  %v1420 = vpop.xlane.xlu0 %1419
  %v1421 = vrcp.pop %v1411
  %v1422 = vrcp.pop %v1414
  %v1423 = vrcp.pop %v1417
  %v1424 = vrcp.pop %v1420
  %1425 = vrot.lane.b32.xlu0 %v954, 32
  %v1426 = vpop.permute.xlu0 %1425
  %1427 = vrot.lane.b32.xlu0 %v955, 32
  %v1428 = vpop.permute.xlu0 %1427
  %v1432 = vsel %vm131, %v1407, 0
  %v1435 = vsel %vm131, %v1408, 0
  %1437 = vmatpush.bf16.msra.mxu0 0
  %1438 = vmatpush.bf16.msra.mxu0 0
  %1439 = vmatpush.bf16.msra.mxu0 0
  %1440 = vmatpush.bf16.msra.mxu0 0
  %1441 = vmatpush.bf16.msra.mxu0 0
  %1442 = vmatpush.bf16.msra.mxu0 0
  %1443 = vmatpush.bf16.msra.mxu0 %v1428
  %1444 = vmatpush.bf16.msra.mxu0 %v1426
  %1445 = vmatmul.bf16.gmra.mxu0 %v1432
  %v1446 = vpop.f32.mrf.mxu0
  %v1447 = vadd.f32 0.0, %v1446
  %v1448 = vpop.f32.mrf.mxu0
  %v1449 = vadd.f32 0.0, %v1448
  %1450 = vmatmul.bf16.gmra.mxu0 %v1435
  %v1451 = vpop.f32.mrf.mxu0
  %v1452 = vadd.f32 0.0, %v1451
  %v1453 = vpop.f32.mrf.mxu0
  %v1454 = vadd.f32 0.0, %v1453
  %1455 = vdwg.mxu0
  %v1456 = vmul.f32 %v1447, %v1421
  %v1457 = vmul.f32 %v1449, %v1422
  %v1458 = vmul.f32 %v1452, %v1423
  %v1459 = vmul.f32 %v1454, %v1424
  %v1460 = vadd.f32 %v1456, %v768
  %v1461 = vadd.f32 %v1457, %v768
  %v1462 = vadd.f32 %v1458, %v768
  %v1463 = vadd.f32 %v1459, %v768
  %v1464 = vmax.f32 %v1460, 0.0
  %v1465 = vmax.f32 %v1461, 0.0
  %v1466 = vmax.f32 %v1462, 0.0
  %v1467 = vmax.f32 %v1463, 0.0
  %1472 = vrot.lane.b32.xlu0 %v1464, 96
  %v1473 = vpop.permute.xlu0 %1472
  %1474 = vrot.lane.b32.xlu0 %v1465, 96
  %v1475 = vpop.permute.xlu0 %1474
  %1476 = vrot.lane.b32.xlu0 %v1466, 96
  %v1477 = vpop.permute.xlu0 %1476
  %1478 = vrot.lane.b32.xlu0 %v1467, 96
  %v1479 = vpop.permute.xlu0 %1478
  %1484 = vst.msk [vmem:[#allocation2] sm:$0xff] %vm794, %v1473
  %1485 = vst.msk [vmem:[#allocation2 + $0x8] sm:$0xff] %vm794, %v1475
  %1486 = vst.msk [vmem:[#allocation2 + $0x10] sm:$0xff] %vm794, %v1477
  %1487 = vst.msk [vmem:[#allocation2 + $0x18] sm:$0xff] %vm794, %v1479
  %v1488 = vld [vmem:[#allocation2] sm:$0xff]
  %v1489 = vld [vmem:[#allocation2 + $0x8] sm:$0xff]
  %v1490 = vld [vmem:[#allocation2 + $0x10] sm:$0xff]
  %v1491 = vld [vmem:[#allocation2 + $0x18] sm:$0xff]
  %1492 = vmatpush.msra.mxu0 %v130
  %1493 = vmatpush.msra.mxu0 %v129
  %1494 = vmatpush.msra.mxu0 %v128
  %1495 = vmatpush.msra.mxu0 %v127
  %1496 = vmatpush.msra.mxu0 %v126
  %1497 = vmatpush.msra.mxu0 %v125
  %1498 = vmatpush.msra.mxu0 %v124
  %1499 = vmatpush.msra.mxu0 %v123
  %1500 = vmatpush.msra.mxu0 %v122
  %1501 = vmatpush.msra.mxu0 %v121
  %1502 = vmatpush.msra.mxu0 %v120
  %1503 = vmatpush.msra.mxu0 %v119
  %1504 = vmatpush.msra.mxu0 %v118
  %1505 = vmatpush.msra.mxu0 %v117
  %1506 = vmatpush.msra.mxu0 %v116
  %1507 = vmatpush.msra.mxu0 %v115
  %1508 = vmatmul.f32.gmra.mxu0 %v1488
  %v1509 = vpop.f32.mrf.mxu0
  %v1510 = vadd.f32 0.0, %v1509
  %1511 = vmatmul.f32.gmra.mxu0 %v1489
  %v1512 = vpop.f32.mrf.mxu0
  %v1513 = vadd.f32 0.0, %v1512
  %1514 = vmatmul.f32.gmra.mxu0 %v1490
  %v1515 = vpop.f32.mrf.mxu0
  %v1516 = vadd.f32 0.0, %v1515
  %1517 = vmatmul.f32.gmra.mxu0 %v1491
  %v1518 = vpop.f32.mrf.mxu0
  %v1519 = vadd.f32 0.0, %v1518
  %1520 = vdwg.mxu0
  %v1521 = vadd.f32 %v832, %v1510
  %v1522 = vadd.f32 %v833, %v1513
  %v1523 = vadd.f32 %v834, %v1516
  %v1524 = vadd.f32 %v835, %v1519
  %v1525 = vld [vmem:[%s7] sm:$0xff]
  %v1526 = vld [vmem:[%s7 + $0x8] sm:$0xff]
  %v1527 = vld [vmem:[%s7 + $0x10] sm:$0xff]
  %v1528 = vld [vmem:[%s7 + $0x18] sm:$0xff]
  %v1529 = vld [vmem:[%s8] sm:$0x1]
  %v1531 = vperm.slane %v1529, 0
  %v1534 = vsel %vm131, %v1521, 0
  %v1537 = vsel %vm131, %v1522, 0
  %v1540 = vsel %vm131, %v1523, 0
  %v1543 = vsel %vm131, %v1524, 0
  %1545 = vmatpush.msra.mxu0 0.0
  %1546 = vmatpush.msra.mxu0 0.0
  %1547 = vmatpush.msra.mxu0 0.0
  %1548 = vmatpush.msra.mxu0 0.0
  %1549 = vmatpush.msra.mxu0 0.0
  %1550 = vmatpush.msra.mxu0 0.0
  %1551 = vmatpush.msra.mxu0 0.0
  %1552 = vmatpush.msra.mxu0 0.0
  %1553 = vmatpush.msra.mxu0 0.0
  %1554 = vmatpush.msra.mxu0 0.0
  %1555 = vmatpush.msra.mxu0 0.0
  %1556 = vmatpush.msra.mxu0 0.0
  %1557 = vmatpush.msra.mxu0 %v1528
  %1558 = vmatpush.msra.mxu0 %v1527
  %1559 = vmatpush.msra.mxu0 %v1526
  %1560 = vmatpush.msra.mxu0 %v1525
  %1561 = vmatmul.f32.gmra.mxu0 %v1534
  %v1562 = vpop.f32.mrf.mxu0
  %v1563 = vadd.f32 %v1531, %v1562
  %1564 = vmatmul.f32.gmra.mxu0 %v1537
  %v1565 = vpop.f32.mrf.mxu0
  %v1566 = vadd.f32 %v1531, %v1565
  %1567 = vmatmul.f32.gmra.mxu0 %v1540
  %v1568 = vpop.f32.mrf.mxu0
  %v1569 = vadd.f32 %v1531, %v1568
  %1570 = vmatmul.f32.gmra.mxu0 %v1543
  %v1571 = vpop.f32.mrf.mxu0
  %v1572 = vadd.f32 %v1531, %v1571
  %1573 = vdwg.mxu0
  %vm1574 = vcmask 39936
  %1575 = vst.msk [vmem:[%s9] sm:$0xff] %vm1574, %v1563
  %1576 = vst.msk [vmem:[%s9 + $0x8] sm:$0xff] %vm1574, %v1566
  %1577 = vst.msk [vmem:[%s9 + $0x10] sm:$0xff] %vm1574, %v1569
  %1578 = vst.msk [vmem:[%s9 + $0x18] sm:$0xff] %vm1574, %v1572
  // Predicated region
  $region38: #{tpu_custom_call.1} parent=0 // pred_check
    _
  $region39: #{tpu_custom_call.1} parent=0 // pred_check_branch
    %1580 = sbr.rel (0) target = $region41
  $region40: #{tpu_custom_call.1} parent=0 // pred_region
    _
  $region41: #{tpu_custom_call.1} parent=0 // pred_fallthru
    _
  // Predicated region
  $region42: #{tpu_custom_call.1} parent=0 // pred_check
    _
  $region43: #{tpu_custom_call.1} parent=0 // pred_check_branch
    %1582 = sbr.rel (0) target = $region45
  $region44: #{tpu_custom_call.1} parent=0 // pred_region
    _
  $region45: #{tpu_custom_call.1} parent=0 // pred_fallthru
    _

</llo_original>
